<compile_context>
chip_gen: v7x
topology: tpu7x:2x2x1
jax: 0.10.0
libtpu: 0.0.40
codegen_flags: <defaults>
</compile_context>

<pallas_src>
import math

import jax
import jax.numpy as jnp
from jax.experimental import pallas as pl
from jax.experimental.pallas import tpu as pltpu


OUT_PAD = 128  # lane-dense padded output width; logits live in columns 0:2


def etcouple_kernel(x_ref, len_ref, win_ref, bin_ref, whh_ref,
                    wfcf_ref, wfcb_ref, bfc_ref, out_ref):
    """x:(T*N,D) bf16  len:(N,1) i32  win:(D,8H) bf16  bin:(1,8H) f32
    whh:(H,4H) bf16  wfcf/wfcb:(H,OUT_PAD) bf16  bfc:(1,OUT_PAD) f32
    out:(N,OUT_PAD) f32."""
    N = len_ref.shape[0]
    T = x_ref.shape[0] // N
    H4 = whh_ref.shape[1]
    H = H4 // 4

    lengths = len_ref[...]               # (N, 1) int32
    w_hh = whh_ref[...]                  # keep weights resident in vregs

    # Single hoisted input projection for BOTH directions over all T steps:
    # one (T*N,D)x(D,8H) MXU push instead of T, biases folded in once.
    proj_all = (jnp.dot(x_ref[...], win_ref[...],
                        preferred_element_type=jnp.float32)
                + bin_ref[...])          # (T*N, 8H) f32

    # Lane-index mask selecting the tanh (g-gate) lanes, hoisted above the loop.
    lane = jax.lax.broadcasted_iota(jnp.int32, (N, H4), 1)
    g_lanes = jnp.logical_and(lane >= 2 * H, lane < 3 * H)

    def activate(gates):
        # Whole-width sigmoid + tanh (EUP), tanh selected only on g-gate lanes.
        return jnp.where(g_lanes, jnp.tanh(gates), jax.nn.sigmoid(gates))

    # Forward recurrence; state carried in registers, fully unrolled (T static).
    h = jnp.zeros((N, H), jnp.float32)
    c = jnp.zeros((N, H), jnp.float32)
    gb = jnp.zeros((N, H4), jnp.float32)  # backward-direction gates at t == length-1

    for t in range(T):
        proj_t = proj_all[t * N:(t + 1) * N]                 # static sublane slice
        gates = proj_t[:, :H4] + jnp.dot(h.astype(jnp.bfloat16), w_hh,
                                         preferred_element_type=jnp.float32)
        act = activate(gates)             # PyTorch gate order: i, f, g, o
        i_g = act[:, 0 * H:1 * H]
        f_g = act[:, 1 * H:2 * H]
        g_g = act[:, 2 * H:3 * H]
        o_g = act[:, 3 * H:4 * H]
        c_new = f_g * c + i_g * g_g
        h_new = o_g * jnp.tanh(c_new)

        valid = lengths > t               # freeze state past length (packed semantics)
        h = jnp.where(valid, h_new, h)
        c = jnp.where(valid, c_new, c)

        is_last = lengths == (t + 1)      # capture backward gates at position length-1
        gb = jnp.where(is_last, proj_t[:, H4:], gb)

    # Reverse direction of the packed BiLSTM at length-1: one cell step from zero
    # (h, c); the f-gate and W_hh_bwd legitimately drop out.
    act_b = activate(gb)
    i_b = act_b[:, 0 * H:1 * H]
    g_b = act_b[:, 2 * H:3 * H]
    o_b = act_b[:, 3 * H:4 * H]
    h_b = o_b * jnp.tanh(i_b * g_b)

    # Epilogue: no cross-lane concat -- two independent small dots + bias.
    out_ref[...] = (
        jnp.dot(h.astype(jnp.bfloat16), wfcf_ref[...],
                preferred_element_type=jnp.float32)
        + jnp.dot(h_b.astype(jnp.bfloat16), wfcb_ref[...],
                  preferred_element_type=jnp.float32)
        + bfc_ref[...])


def init_params(key, input_size, hidden_dim):
    """PyTorch-style deterministic init (uniform +-1/sqrt(H))."""
    D, H = input_size, hidden_dim
    k = 1.0 / math.sqrt(H)
    names_shapes = [
        ("w_ih_f", (4 * H, D)), ("w_hh_f", (4 * H, H)),
        ("b_ih_f", (4 * H,)), ("b_hh_f", (4 * H,)),
        ("w_ih_b", (4 * H, D)), ("w_hh_b", (4 * H, H)),
        ("b_ih_b", (4 * H,)), ("b_hh_b", (4 * H,)),
        ("fc_w", (2, 2 * H)), ("fc_b", (2,)),
    ]
    keys = jax.random.split(key, len(names_shapes))
    return {n: jax.random.uniform(kk, s, jnp.float32, -k, k)
            for kk, (n, s) in zip(keys, names_shapes)}


def pack_params(raw, hidden_dim):
    """Convert PyTorch-layout params to the kernel's fused, transposed, bf16 layout."""
    H = hidden_dim
    w_in = jnp.concatenate([raw["w_ih_f"].T, raw["w_ih_b"].T],
                           axis=1).astype(jnp.bfloat16)                    # (D, 8H)
    b_in = jnp.concatenate([raw["b_ih_f"] + raw["b_hh_f"],
                            raw["b_ih_b"] + raw["b_hh_b"]]).reshape(1, 8 * H)
    w_hh = raw["w_hh_f"].T.astype(jnp.bfloat16)                            # (H, 4H)
    fc_w_t = raw["fc_w"].T                                                 # (2H, 2)
    wfc_f = (jnp.zeros((H, OUT_PAD), jnp.float32)
             .at[:, :2].set(fc_w_t[:H])).astype(jnp.bfloat16)
    wfc_b = (jnp.zeros((H, OUT_PAD), jnp.float32)
             .at[:, :2].set(fc_w_t[H:])).astype(jnp.bfloat16)
    bfc = jnp.zeros((1, OUT_PAD), jnp.float32).at[:, :2].set(raw["fc_b"])
    return dict(w_in=w_in, b_in=b_in, w_hh=w_hh, wfc_f=wfc_f, wfc_b=wfc_b, bfc=bfc)


def etcouple_forward(batched_tuple_samples, lengths, packed, hidden_dim):
    """Mirrors ETCouple.forward((batched_tuple_samples, lengths)).

    Precondition: 1 <= lengths <= T elementwise (same as PyTorch's
    pack_padded_sequence requirement that lengths be positive and <= seq dim).
    """
    B, P, T, D = batched_tuple_samples.shape
    N = B * P

    x2 = batched_tuple_samples.reshape(N, T, D)
    x_flat = (jnp.transpose(x2, (1, 0, 2))            # (T, N, D) time-major
              .reshape(T * N, D).astype(jnp.bfloat16))  # one slab -> one proj dot
    len2 = lengths.reshape(N, 1).astype(jnp.int32)

    vmem = pl.BlockSpec(memory_space=pltpu.MemorySpace.VMEM)
    out_padded = pl.pallas_call(
        etcouple_kernel,
        out_shape=jax.ShapeDtypeStruct((N, OUT_PAD), jnp.float32),
        in_specs=[vmem] * 8,
        out_specs=vmem,
    )(x_flat, len2, packed["w_in"], packed["b_in"], packed["w_hh"],
      packed["wfc_f"], packed["wfc_b"], packed["bfc"])

    logits = out_padded[:, :2]
    prog_output = logits[:, 0]
    etc_output = logits[:, 1]
    prog_pred = jax.nn.sigmoid(prog_output)
    etc_pred = jax.nn.sigmoid(etc_output)
    return (prog_output, etc_output), (prog_pred, etc_pred)


def reference_forward(batched_tuple_samples, lengths, raw, hidden_dim):
    """Pure-JAX f32 reference of the packed BiLSTM -> fc -> select(length-1) path."""
    B, P, T, D = batched_tuple_samples.shape
    N, H = B * P, hidden_dim
    x2 = batched_tuple_samples.reshape(N, T, D).astype(jnp.float32)
    len2 = lengths.reshape(N).astype(jnp.int32)

    def cell(x_t, h, c, w_ih, w_hh, b_ih, b_hh):
        gates = x_t @ w_ih.T + h @ w_hh.T + b_ih + b_hh
        i, f, g, o = jnp.split(gates, 4, axis=-1)
        i, f, o = jax.nn.sigmoid(i), jax.nn.sigmoid(f), jax.nn.sigmoid(o)
        g = jnp.tanh(g)
        c2 = f * c + i * g
        return o * jnp.tanh(c2), c2

    h = jnp.zeros((N, H), jnp.float32)
    c = jnp.zeros((N, H), jnp.float32)
    for t in range(T):
        h2, c2 = cell(x2[:, t], h, c, raw["w_ih_f"], raw["w_hh_f"],
                      raw["b_ih_f"], raw["b_hh_f"])
        valid = (len2 > t)[:, None]
        h = jnp.where(valid, h2, h)
        c = jnp.where(valid, c2, c)

    x_last = x2[jnp.arange(N), len2 - 1]
    hb, _ = cell(x_last, jnp.zeros((N, H), jnp.float32),
                 jnp.zeros((N, H), jnp.float32),
                 raw["w_ih_b"], raw["w_hh_b"], raw["b_ih_b"], raw["b_hh_b"])

    logits = jnp.concatenate([h, hb], axis=-1) @ raw["fc_w"].T + raw["fc_b"]
    prog, etc = logits[:, 0], logits[:, 1]
    return (prog, etc), (jax.nn.sigmoid(prog), jax.nn.sigmoid(etc))


if __name__ == "__main__":
    # Small shapes implied by the forward: (batch=2, couple=2, seq=8, input_size=8),
    # hidden_dim=16.
    B, P, T, D, H = 2, 2, 8, 8, 16

    key = jax.random.PRNGKey(0)
    k_x, k_params = jax.random.split(key)
    batched_tuple_samples = jax.random.normal(k_x, (B, P, T, D), jnp.float32)
    lengths = jnp.array([[8, 5], [3, 7]], dtype=jnp.int32)   # (B, P), all in [1, T]
    assert bool(jnp.all(lengths >= 1)) and bool(jnp.all(lengths <= T)), \
        "ETCouple precondition: 1 <= length <= T"

    raw = init_params(k_params, D, H)
    packed = pack_params(raw, H)

    (prog_out, etc_out), (prog_pred, etc_pred) = etcouple_forward(
        batched_tuple_samples, lengths, packed, H)
    jax.block_until_ready((prog_out, etc_out, prog_pred, etc_pred))

    (r_prog, r_etc), (r_prog_p, r_etc_p) = reference_forward(
        batched_tuple_samples, lengths, raw, H)
    assert prog_out.shape == (B * P,) and etc_out.shape == (B * P,)
    # bf16 MXU inputs with f32 accumulation: ~1e-2-scale agreement vs f32 reference.
    assert jnp.allclose(prog_out, r_prog, atol=2e-2, rtol=2e-2)
    assert jnp.allclose(etc_out, r_etc, atol=2e-2, rtol=2e-2)
    assert jnp.allclose(prog_pred, r_prog_p, atol=2e-2, rtol=2e-2)
    assert jnp.allclose(etc_pred, r_etc_p, atol=2e-2, rtol=2e-2)

    print("KERNEL_OK")
</pallas_src>

<mosaic_0001>
module attributes {stable_mosaic.version = 11 : i64} {
  func.func @etcouple_kernel(%arg0: memref<32x8xbf16, #tpu.memory_space<vmem>>, %arg1: memref<4x1xi32, #tpu.memory_space<vmem>>, %arg2: memref<8x128xbf16, #tpu.memory_space<vmem>>, %arg3: memref<1x128xf32, #tpu.memory_space<vmem>>, %arg4: memref<16x64xbf16, #tpu.memory_space<vmem>>, %arg5: memref<16x128xbf16, #tpu.memory_space<vmem>>, %arg6: memref<16x128xbf16, #tpu.memory_space<vmem>>, %arg7: memref<1x128xf32, #tpu.memory_space<vmem>>, %arg8: memref<4x128xf32, #tpu.memory_space<vmem>>) attributes {dimension_semantics = [], scalar_prefetch = 0 : i64, scratch_operands = 0 : i64, tpu.core_type = #tpu.core_type<tc>} {
    %c0 = arith.constant 0 : index
    %c0_0 = arith.constant 0 : index
    %0 = vector.load %arg1[%c0, %c0_0] : memref<4x1xi32, #tpu.memory_space<vmem>>, vector<4x1xi32>
    %c0_1 = arith.constant 0 : index
    %c0_2 = arith.constant 0 : index
    %1 = vector.load %arg4[%c0_1, %c0_2] : memref<16x64xbf16, #tpu.memory_space<vmem>>, vector<16x64xbf16>
    %c0_3 = arith.constant 0 : index
    %c0_4 = arith.constant 0 : index
    %2 = vector.load %arg0[%c0_3, %c0_4] : memref<32x8xbf16, #tpu.memory_space<vmem>>, vector<32x8xbf16>
    %c0_5 = arith.constant 0 : index
    %c0_6 = arith.constant 0 : index
    %3 = vector.load %arg2[%c0_5, %c0_6] : memref<8x128xbf16, #tpu.memory_space<vmem>>, vector<8x128xbf16>
    %cst = arith.constant dense<0.000000e+00> : vector<32x128xf32>
    %4 = tpu.matmul %2, %3, %cst {dimension_numbers = #tpu.dot_dimension_numbers<[1], [0], [0], [1], [0, 0, 1, 1], [], []>} : vector<32x8xbf16>, vector<8x128xbf16>, vector<32x128xf32> -> vector<32x128xf32>
    %c0_7 = arith.constant 0 : index
    %c0_8 = arith.constant 0 : index
    %5 = vector.load %arg3[%c0_7, %c0_8] : memref<1x128xf32, #tpu.memory_space<vmem>>, vector<1x128xf32>
    %6 = vector.broadcast %5 : vector<1x128xf32> to vector<32x128xf32>
    %7 = arith.addf %4, %6 : vector<32x128xf32>
    %8 = tpu.iota {dimensions = array<i32: 1>} : vector<4x64xi32>
    %c32_i32 = arith.constant 32 : i32
    %9 = vector.broadcast %c32_i32 : i32 to vector<4x64xi32>
    %10 = arith.cmpi sge, %8, %9 : vector<4x64xi32>
    %c48_i32 = arith.constant 48 : i32
    %11 = vector.broadcast %c48_i32 : i32 to vector<4x64xi32>
    %12 = arith.cmpi slt, %8, %11 : vector<4x64xi32>
    %13 = arith.andi %10, %12 : vector<4x64xi1>
    %cst_9 = arith.constant 0.000000e+00 : f32
    %14 = vector.broadcast %cst_9 : f32 to vector<4x16xf32>
    %cst_10 = arith.constant 0.000000e+00 : f32
    %15 = vector.broadcast %cst_10 : f32 to vector<4x16xf32>
    %cst_11 = arith.constant 0.000000e+00 : f32
    %16 = vector.broadcast %cst_11 : f32 to vector<4x64xf32>
    %17 = vector.extract_strided_slice %7 {offsets = [0, 0], sizes = [4, 128], strides = [1, 1]} : vector<32x128xf32> to vector<4x128xf32>
    %18 = vector.extract_strided_slice %17 {offsets = [0, 0], sizes = [4, 64], strides = [1, 1]} : vector<4x128xf32> to vector<4x64xf32>
    %19 = arith.truncf %14 : vector<4x16xf32> to vector<4x16xbf16>
    %cst_12 = arith.constant dense<0.000000e+00> : vector<4x64xf32>
    %20 = tpu.matmul %19, %1, %cst_12 {dimension_numbers = #tpu.dot_dimension_numbers<[1], [0], [0], [1], [0, 0, 1, 1], [], []>} : vector<4x16xbf16>, vector<16x64xbf16>, vector<4x64xf32> -> vector<4x64xf32>
    %21 = arith.addf %18, %20 : vector<4x64xf32>
    %22 = math.tanh %21 : vector<4x64xf32>
    %23 = arith.negf %21 : vector<4x64xf32>
    %24 = math.exp %23 : vector<4x64xf32>
    %cst_13 = arith.constant 1.000000e+00 : f32
    %25 = vector.broadcast %cst_13 : f32 to vector<4x64xf32>
    %26 = arith.addf %25, %24 : vector<4x64xf32>
    %27 = arith.divf %25, %26 : vector<4x64xf32>
    %28 = arith.select %13, %22, %27 : vector<4x64xi1>, vector<4x64xf32>
    %29 = vector.extract_strided_slice %28 {offsets = [0, 0], sizes = [4, 16], strides = [1, 1]} : vector<4x64xf32> to vector<4x16xf32>
    %30 = vector.extract_strided_slice %28 {offsets = [0, 16], sizes = [4, 16], strides = [1, 1]} : vector<4x64xf32> to vector<4x16xf32>
    %31 = vector.extract_strided_slice %28 {offsets = [0, 32], sizes = [4, 16], strides = [1, 1]} : vector<4x64xf32> to vector<4x16xf32>
    %32 = vector.extract_strided_slice %28 {offsets = [0, 48], sizes = [4, 16], strides = [1, 1]} : vector<4x64xf32> to vector<4x16xf32>
    %33 = arith.mulf %30, %15 : vector<4x16xf32>
    %34 = arith.mulf %29, %31 : vector<4x16xf32>
    %35 = arith.addf %33, %34 : vector<4x16xf32>
    %36 = math.tanh %35 : vector<4x16xf32>
    %37 = arith.mulf %32, %36 : vector<4x16xf32>
    %c0_i32 = arith.constant 0 : i32
    %38 = vector.broadcast %c0_i32 : i32 to vector<4x1xi32>
    %39 = arith.cmpi sgt, %0, %38 : vector<4x1xi32>
    %40 = vector.shape_cast %39 : vector<4x1xi1> to vector<4x1xi1>
    %41 = vector.broadcast %40 : vector<4x1xi1> to vector<4x16xi1>
    %42 = arith.select %41, %37, %14 : vector<4x16xi1>, vector<4x16xf32>
    %43 = vector.shape_cast %39 : vector<4x1xi1> to vector<4x1xi1>
    %44 = vector.broadcast %43 : vector<4x1xi1> to vector<4x16xi1>
    %45 = arith.select %44, %35, %15 : vector<4x16xi1>, vector<4x16xf32>
    %c1_i32 = arith.constant 1 : i32
    %46 = vector.broadcast %c1_i32 : i32 to vector<4x1xi32>
    %47 = arith.cmpi eq, %0, %46 : vector<4x1xi32>
    %48 = vector.extract_strided_slice %17 {offsets = [0, 64], sizes = [4, 64], strides = [1, 1]} : vector<4x128xf32> to vector<4x64xf32>
    %49 = vector.shape_cast %47 : vector<4x1xi1> to vector<4x1xi1>
    %50 = vector.broadcast %49 : vector<4x1xi1> to vector<4x64xi1>
    %51 = arith.select %50, %48, %16 : vector<4x64xi1>, vector<4x64xf32>
    %52 = vector.extract_strided_slice %7 {offsets = [4, 0], sizes = [4, 128], strides = [1, 1]} : vector<32x128xf32> to vector<4x128xf32>
    %53 = vector.extract_strided_slice %52 {offsets = [0, 0], sizes = [4, 64], strides = [1, 1]} : vector<4x128xf32> to vector<4x64xf32>
    %54 = arith.truncf %42 : vector<4x16xf32> to vector<4x16xbf16>
    %cst_14 = arith.constant dense<0.000000e+00> : vector<4x64xf32>
    %55 = tpu.matmul %54, %1, %cst_14 {dimension_numbers = #tpu.dot_dimension_numbers<[1], [0], [0], [1], [0, 0, 1, 1], [], []>} : vector<4x16xbf16>, vector<16x64xbf16>, vector<4x64xf32> -> vector<4x64xf32>
    %56 = arith.addf %53, %55 : vector<4x64xf32>
    %57 = math.tanh %56 : vector<4x64xf32>
    %58 = arith.negf %56 : vector<4x64xf32>
    %59 = math.exp %58 : vector<4x64xf32>
    %cst_15 = arith.constant 1.000000e+00 : f32
    %60 = vector.broadcast %cst_15 : f32 to vector<4x64xf32>
    %61 = arith.addf %60, %59 : vector<4x64xf32>
    %62 = arith.divf %60, %61 : vector<4x64xf32>
    %63 = arith.select %13, %57, %62 : vector<4x64xi1>, vector<4x64xf32>
    %64 = vector.extract_strided_slice %63 {offsets = [0, 0], sizes = [4, 16], strides = [1, 1]} : vector<4x64xf32> to vector<4x16xf32>
    %65 = vector.extract_strided_slice %63 {offsets = [0, 16], sizes = [4, 16], strides = [1, 1]} : vector<4x64xf32> to vector<4x16xf32>
    %66 = vector.extract_strided_slice %63 {offsets = [0, 32], sizes = [4, 16], strides = [1, 1]} : vector<4x64xf32> to vector<4x16xf32>
    %67 = vector.extract_strided_slice %63 {offsets = [0, 48], sizes = [4, 16], strides = [1, 1]} : vector<4x64xf32> to vector<4x16xf32>
    %68 = arith.mulf %65, %45 : vector<4x16xf32>
    %69 = arith.mulf %64, %66 : vector<4x16xf32>
    %70 = arith.addf %68, %69 : vector<4x16xf32>
    %71 = math.tanh %70 : vector<4x16xf32>
    %72 = arith.mulf %67, %71 : vector<4x16xf32>
    %c1_i32_16 = arith.constant 1 : i32
    %73 = vector.broadcast %c1_i32_16 : i32 to vector<4x1xi32>
    %74 = arith.cmpi sgt, %0, %73 : vector<4x1xi32>
    %75 = vector.shape_cast %74 : vector<4x1xi1> to vector<4x1xi1>
    %76 = vector.broadcast %75 : vector<4x1xi1> to vector<4x16xi1>
    %77 = arith.select %76, %72, %42 : vector<4x16xi1>, vector<4x16xf32>
    %78 = vector.shape_cast %74 : vector<4x1xi1> to vector<4x1xi1>
    %79 = vector.broadcast %78 : vector<4x1xi1> to vector<4x16xi1>
    %80 = arith.select %79, %70, %45 : vector<4x16xi1>, vector<4x16xf32>
    %c2_i32 = arith.constant 2 : i32
    %81 = vector.broadcast %c2_i32 : i32 to vector<4x1xi32>
    %82 = arith.cmpi eq, %0, %81 : vector<4x1xi32>
    %83 = vector.extract_strided_slice %52 {offsets = [0, 64], sizes = [4, 64], strides = [1, 1]} : vector<4x128xf32> to vector<4x64xf32>
    %84 = vector.shape_cast %82 : vector<4x1xi1> to vector<4x1xi1>
    %85 = vector.broadcast %84 : vector<4x1xi1> to vector<4x64xi1>
    %86 = arith.select %85, %83, %51 : vector<4x64xi1>, vector<4x64xf32>
    %87 = vector.extract_strided_slice %7 {offsets = [8, 0], sizes = [4, 128], strides = [1, 1]} : vector<32x128xf32> to vector<4x128xf32>
    %88 = vector.extract_strided_slice %87 {offsets = [0, 0], sizes = [4, 64], strides = [1, 1]} : vector<4x128xf32> to vector<4x64xf32>
    %89 = arith.truncf %77 : vector<4x16xf32> to vector<4x16xbf16>
    %cst_17 = arith.constant dense<0.000000e+00> : vector<4x64xf32>
    %90 = tpu.matmul %89, %1, %cst_17 {dimension_numbers = #tpu.dot_dimension_numbers<[1], [0], [0], [1], [0, 0, 1, 1], [], []>} : vector<4x16xbf16>, vector<16x64xbf16>, vector<4x64xf32> -> vector<4x64xf32>
    %91 = arith.addf %88, %90 : vector<4x64xf32>
    %92 = math.tanh %91 : vector<4x64xf32>
    %93 = arith.negf %91 : vector<4x64xf32>
    %94 = math.exp %93 : vector<4x64xf32>
    %cst_18 = arith.constant 1.000000e+00 : f32
    %95 = vector.broadcast %cst_18 : f32 to vector<4x64xf32>
    %96 = arith.addf %95, %94 : vector<4x64xf32>
    %97 = arith.divf %95, %96 : vector<4x64xf32>
    %98 = arith.select %13, %92, %97 : vector<4x64xi1>, vector<4x64xf32>
    %99 = vector.extract_strided_slice %98 {offsets = [0, 0], sizes = [4, 16], strides = [1, 1]} : vector<4x64xf32> to vector<4x16xf32>
    %100 = vector.extract_strided_slice %98 {offsets = [0, 16], sizes = [4, 16], strides = [1, 1]} : vector<4x64xf32> to vector<4x16xf32>
    %101 = vector.extract_strided_slice %98 {offsets = [0, 32], sizes = [4, 16], strides = [1, 1]} : vector<4x64xf32> to vector<4x16xf32>
    %102 = vector.extract_strided_slice %98 {offsets = [0, 48], sizes = [4, 16], strides = [1, 1]} : vector<4x64xf32> to vector<4x16xf32>
    %103 = arith.mulf %100, %80 : vector<4x16xf32>
    %104 = arith.mulf %99, %101 : vector<4x16xf32>
    %105 = arith.addf %103, %104 : vector<4x16xf32>
    %106 = math.tanh %105 : vector<4x16xf32>
    %107 = arith.mulf %102, %106 : vector<4x16xf32>
    %c2_i32_19 = arith.constant 2 : i32
    %108 = vector.broadcast %c2_i32_19 : i32 to vector<4x1xi32>
    %109 = arith.cmpi sgt, %0, %108 : vector<4x1xi32>
    %110 = vector.shape_cast %109 : vector<4x1xi1> to vector<4x1xi1>
    %111 = vector.broadcast %110 : vector<4x1xi1> to vector<4x16xi1>
    %112 = arith.select %111, %107, %77 : vector<4x16xi1>, vector<4x16xf32>
    %113 = vector.shape_cast %109 : vector<4x1xi1> to vector<4x1xi1>
    %114 = vector.broadcast %113 : vector<4x1xi1> to vector<4x16xi1>
    %115 = arith.select %114, %105, %80 : vector<4x16xi1>, vector<4x16xf32>
    %c3_i32 = arith.constant 3 : i32
    %116 = vector.broadcast %c3_i32 : i32 to vector<4x1xi32>
    %117 = arith.cmpi eq, %0, %116 : vector<4x1xi32>
    %118 = vector.extract_strided_slice %87 {offsets = [0, 64], sizes = [4, 64], strides = [1, 1]} : vector<4x128xf32> to vector<4x64xf32>
    %119 = vector.shape_cast %117 : vector<4x1xi1> to vector<4x1xi1>
    %120 = vector.broadcast %119 : vector<4x1xi1> to vector<4x64xi1>
    %121 = arith.select %120, %118, %86 : vector<4x64xi1>, vector<4x64xf32>
    %122 = vector.extract_strided_slice %7 {offsets = [12, 0], sizes = [4, 128], strides = [1, 1]} : vector<32x128xf32> to vector<4x128xf32>
    %123 = vector.extract_strided_slice %122 {offsets = [0, 0], sizes = [4, 64], strides = [1, 1]} : vector<4x128xf32> to vector<4x64xf32>
    %124 = arith.truncf %112 : vector<4x16xf32> to vector<4x16xbf16>
    %cst_20 = arith.constant dense<0.000000e+00> : vector<4x64xf32>
    %125 = tpu.matmul %124, %1, %cst_20 {dimension_numbers = #tpu.dot_dimension_numbers<[1], [0], [0], [1], [0, 0, 1, 1], [], []>} : vector<4x16xbf16>, vector<16x64xbf16>, vector<4x64xf32> -> vector<4x64xf32>
    %126 = arith.addf %123, %125 : vector<4x64xf32>
    %127 = math.tanh %126 : vector<4x64xf32>
    %128 = arith.negf %126 : vector<4x64xf32>
    %129 = math.exp %128 : vector<4x64xf32>
    %cst_21 = arith.constant 1.000000e+00 : f32
    %130 = vector.broadcast %cst_21 : f32 to vector<4x64xf32>
    %131 = arith.addf %130, %129 : vector<4x64xf32>
    %132 = arith.divf %130, %131 : vector<4x64xf32>
    %133 = arith.select %13, %127, %132 : vector<4x64xi1>, vector<4x64xf32>
    %134 = vector.extract_strided_slice %133 {offsets = [0, 0], sizes = [4, 16], strides = [1, 1]} : vector<4x64xf32> to vector<4x16xf32>
    %135 = vector.extract_strided_slice %133 {offsets = [0, 16], sizes = [4, 16], strides = [1, 1]} : vector<4x64xf32> to vector<4x16xf32>
    %136 = vector.extract_strided_slice %133 {offsets = [0, 32], sizes = [4, 16], strides = [1, 1]} : vector<4x64xf32> to vector<4x16xf32>
    %137 = vector.extract_strided_slice %133 {offsets = [0, 48], sizes = [4, 16], strides = [1, 1]} : vector<4x64xf32> to vector<4x16xf32>
    %138 = arith.mulf %135, %115 : vector<4x16xf32>
    %139 = arith.mulf %134, %136 : vector<4x16xf32>
    %140 = arith.addf %138, %139 : vector<4x16xf32>
    %141 = math.tanh %140 : vector<4x16xf32>
    %142 = arith.mulf %137, %141 : vector<4x16xf32>
    %c3_i32_22 = arith.constant 3 : i32
    %143 = vector.broadcast %c3_i32_22 : i32 to vector<4x1xi32>
    %144 = arith.cmpi sgt, %0, %143 : vector<4x1xi32>
    %145 = vector.shape_cast %144 : vector<4x1xi1> to vector<4x1xi1>
    %146 = vector.broadcast %145 : vector<4x1xi1> to vector<4x16xi1>
    %147 = arith.select %146, %142, %112 : vector<4x16xi1>, vector<4x16xf32>
    %148 = vector.shape_cast %144 : vector<4x1xi1> to vector<4x1xi1>
    %149 = vector.broadcast %148 : vector<4x1xi1> to vector<4x16xi1>
    %150 = arith.select %149, %140, %115 : vector<4x16xi1>, vector<4x16xf32>
    %c4_i32 = arith.constant 4 : i32
    %151 = vector.broadcast %c4_i32 : i32 to vector<4x1xi32>
    %152 = arith.cmpi eq, %0, %151 : vector<4x1xi32>
    %153 = vector.extract_strided_slice %122 {offsets = [0, 64], sizes = [4, 64], strides = [1, 1]} : vector<4x128xf32> to vector<4x64xf32>
    %154 = vector.shape_cast %152 : vector<4x1xi1> to vector<4x1xi1>
    %155 = vector.broadcast %154 : vector<4x1xi1> to vector<4x64xi1>
    %156 = arith.select %155, %153, %121 : vector<4x64xi1>, vector<4x64xf32>
    %157 = vector.extract_strided_slice %7 {offsets = [16, 0], sizes = [4, 128], strides = [1, 1]} : vector<32x128xf32> to vector<4x128xf32>
    %158 = vector.extract_strided_slice %157 {offsets = [0, 0], sizes = [4, 64], strides = [1, 1]} : vector<4x128xf32> to vector<4x64xf32>
    %159 = arith.truncf %147 : vector<4x16xf32> to vector<4x16xbf16>
    %cst_23 = arith.constant dense<0.000000e+00> : vector<4x64xf32>
    %160 = tpu.matmul %159, %1, %cst_23 {dimension_numbers = #tpu.dot_dimension_numbers<[1], [0], [0], [1], [0, 0, 1, 1], [], []>} : vector<4x16xbf16>, vector<16x64xbf16>, vector<4x64xf32> -> vector<4x64xf32>
    %161 = arith.addf %158, %160 : vector<4x64xf32>
    %162 = math.tanh %161 : vector<4x64xf32>
    %163 = arith.negf %161 : vector<4x64xf32>
    %164 = math.exp %163 : vector<4x64xf32>
    %cst_24 = arith.constant 1.000000e+00 : f32
    %165 = vector.broadcast %cst_24 : f32 to vector<4x64xf32>
    %166 = arith.addf %165, %164 : vector<4x64xf32>
    %167 = arith.divf %165, %166 : vector<4x64xf32>
    %168 = arith.select %13, %162, %167 : vector<4x64xi1>, vector<4x64xf32>
    %169 = vector.extract_strided_slice %168 {offsets = [0, 0], sizes = [4, 16], strides = [1, 1]} : vector<4x64xf32> to vector<4x16xf32>
    %170 = vector.extract_strided_slice %168 {offsets = [0, 16], sizes = [4, 16], strides = [1, 1]} : vector<4x64xf32> to vector<4x16xf32>
    %171 = vector.extract_strided_slice %168 {offsets = [0, 32], sizes = [4, 16], strides = [1, 1]} : vector<4x64xf32> to vector<4x16xf32>
    %172 = vector.extract_strided_slice %168 {offsets = [0, 48], sizes = [4, 16], strides = [1, 1]} : vector<4x64xf32> to vector<4x16xf32>
    %173 = arith.mulf %170, %150 : vector<4x16xf32>
    %174 = arith.mulf %169, %171 : vector<4x16xf32>
    %175 = arith.addf %173, %174 : vector<4x16xf32>
    %176 = math.tanh %175 : vector<4x16xf32>
    %177 = arith.mulf %172, %176 : vector<4x16xf32>
    %c4_i32_25 = arith.constant 4 : i32
    %178 = vector.broadcast %c4_i32_25 : i32 to vector<4x1xi32>
    %179 = arith.cmpi sgt, %0, %178 : vector<4x1xi32>
    %180 = vector.shape_cast %179 : vector<4x1xi1> to vector<4x1xi1>
    %181 = vector.broadcast %180 : vector<4x1xi1> to vector<4x16xi1>
    %182 = arith.select %181, %177, %147 : vector<4x16xi1>, vector<4x16xf32>
    %183 = vector.shape_cast %179 : vector<4x1xi1> to vector<4x1xi1>
    %184 = vector.broadcast %183 : vector<4x1xi1> to vector<4x16xi1>
    %185 = arith.select %184, %175, %150 : vector<4x16xi1>, vector<4x16xf32>
    %c5_i32 = arith.constant 5 : i32
    %186 = vector.broadcast %c5_i32 : i32 to vector<4x1xi32>
    %187 = arith.cmpi eq, %0, %186 : vector<4x1xi32>
    %188 = vector.extract_strided_slice %157 {offsets = [0, 64], sizes = [4, 64], strides = [1, 1]} : vector<4x128xf32> to vector<4x64xf32>
    %189 = vector.shape_cast %187 : vector<4x1xi1> to vector<4x1xi1>
    %190 = vector.broadcast %189 : vector<4x1xi1> to vector<4x64xi1>
    %191 = arith.select %190, %188, %156 : vector<4x64xi1>, vector<4x64xf32>
    %192 = vector.extract_strided_slice %7 {offsets = [20, 0], sizes = [4, 128], strides = [1, 1]} : vector<32x128xf32> to vector<4x128xf32>
    %193 = vector.extract_strided_slice %192 {offsets = [0, 0], sizes = [4, 64], strides = [1, 1]} : vector<4x128xf32> to vector<4x64xf32>
    %194 = arith.truncf %182 : vector<4x16xf32> to vector<4x16xbf16>
    %cst_26 = arith.constant dense<0.000000e+00> : vector<4x64xf32>
    %195 = tpu.matmul %194, %1, %cst_26 {dimension_numbers = #tpu.dot_dimension_numbers<[1], [0], [0], [1], [0, 0, 1, 1], [], []>} : vector<4x16xbf16>, vector<16x64xbf16>, vector<4x64xf32> -> vector<4x64xf32>
    %196 = arith.addf %193, %195 : vector<4x64xf32>
    %197 = math.tanh %196 : vector<4x64xf32>
    %198 = arith.negf %196 : vector<4x64xf32>
    %199 = math.exp %198 : vector<4x64xf32>
    %cst_27 = arith.constant 1.000000e+00 : f32
    %200 = vector.broadcast %cst_27 : f32 to vector<4x64xf32>
    %201 = arith.addf %200, %199 : vector<4x64xf32>
    %202 = arith.divf %200, %201 : vector<4x64xf32>
    %203 = arith.select %13, %197, %202 : vector<4x64xi1>, vector<4x64xf32>
    %204 = vector.extract_strided_slice %203 {offsets = [0, 0], sizes = [4, 16], strides = [1, 1]} : vector<4x64xf32> to vector<4x16xf32>
    %205 = vector.extract_strided_slice %203 {offsets = [0, 16], sizes = [4, 16], strides = [1, 1]} : vector<4x64xf32> to vector<4x16xf32>
    %206 = vector.extract_strided_slice %203 {offsets = [0, 32], sizes = [4, 16], strides = [1, 1]} : vector<4x64xf32> to vector<4x16xf32>
    %207 = vector.extract_strided_slice %203 {offsets = [0, 48], sizes = [4, 16], strides = [1, 1]} : vector<4x64xf32> to vector<4x16xf32>
    %208 = arith.mulf %205, %185 : vector<4x16xf32>
    %209 = arith.mulf %204, %206 : vector<4x16xf32>
    %210 = arith.addf %208, %209 : vector<4x16xf32>
    %211 = math.tanh %210 : vector<4x16xf32>
    %212 = arith.mulf %207, %211 : vector<4x16xf32>
    %c5_i32_28 = arith.constant 5 : i32
    %213 = vector.broadcast %c5_i32_28 : i32 to vector<4x1xi32>
    %214 = arith.cmpi sgt, %0, %213 : vector<4x1xi32>
    %215 = vector.shape_cast %214 : vector<4x1xi1> to vector<4x1xi1>
    %216 = vector.broadcast %215 : vector<4x1xi1> to vector<4x16xi1>
    %217 = arith.select %216, %212, %182 : vector<4x16xi1>, vector<4x16xf32>
    %218 = vector.shape_cast %214 : vector<4x1xi1> to vector<4x1xi1>
    %219 = vector.broadcast %218 : vector<4x1xi1> to vector<4x16xi1>
    %220 = arith.select %219, %210, %185 : vector<4x16xi1>, vector<4x16xf32>
    %c6_i32 = arith.constant 6 : i32
    %221 = vector.broadcast %c6_i32 : i32 to vector<4x1xi32>
    %222 = arith.cmpi eq, %0, %221 : vector<4x1xi32>
    %223 = vector.extract_strided_slice %192 {offsets = [0, 64], sizes = [4, 64], strides = [1, 1]} : vector<4x128xf32> to vector<4x64xf32>
    %224 = vector.shape_cast %222 : vector<4x1xi1> to vector<4x1xi1>
    %225 = vector.broadcast %224 : vector<4x1xi1> to vector<4x64xi1>
    %226 = arith.select %225, %223, %191 : vector<4x64xi1>, vector<4x64xf32>
    %227 = vector.extract_strided_slice %7 {offsets = [24, 0], sizes = [4, 128], strides = [1, 1]} : vector<32x128xf32> to vector<4x128xf32>
    %228 = vector.extract_strided_slice %227 {offsets = [0, 0], sizes = [4, 64], strides = [1, 1]} : vector<4x128xf32> to vector<4x64xf32>
    %229 = arith.truncf %217 : vector<4x16xf32> to vector<4x16xbf16>
    %cst_29 = arith.constant dense<0.000000e+00> : vector<4x64xf32>
    %230 = tpu.matmul %229, %1, %cst_29 {dimension_numbers = #tpu.dot_dimension_numbers<[1], [0], [0], [1], [0, 0, 1, 1], [], []>} : vector<4x16xbf16>, vector<16x64xbf16>, vector<4x64xf32> -> vector<4x64xf32>
    %231 = arith.addf %228, %230 : vector<4x64xf32>
    %232 = math.tanh %231 : vector<4x64xf32>
    %233 = arith.negf %231 : vector<4x64xf32>
    %234 = math.exp %233 : vector<4x64xf32>
    %cst_30 = arith.constant 1.000000e+00 : f32
    %235 = vector.broadcast %cst_30 : f32 to vector<4x64xf32>
    %236 = arith.addf %235, %234 : vector<4x64xf32>
    %237 = arith.divf %235, %236 : vector<4x64xf32>
    %238 = arith.select %13, %232, %237 : vector<4x64xi1>, vector<4x64xf32>
    %239 = vector.extract_strided_slice %238 {offsets = [0, 0], sizes = [4, 16], strides = [1, 1]} : vector<4x64xf32> to vector<4x16xf32>
    %240 = vector.extract_strided_slice %238 {offsets = [0, 16], sizes = [4, 16], strides = [1, 1]} : vector<4x64xf32> to vector<4x16xf32>
    %241 = vector.extract_strided_slice %238 {offsets = [0, 32], sizes = [4, 16], strides = [1, 1]} : vector<4x64xf32> to vector<4x16xf32>
    %242 = vector.extract_strided_slice %238 {offsets = [0, 48], sizes = [4, 16], strides = [1, 1]} : vector<4x64xf32> to vector<4x16xf32>
    %243 = arith.mulf %240, %220 : vector<4x16xf32>
    %244 = arith.mulf %239, %241 : vector<4x16xf32>
    %245 = arith.addf %243, %244 : vector<4x16xf32>
    %246 = math.tanh %245 : vector<4x16xf32>
    %247 = arith.mulf %242, %246 : vector<4x16xf32>
    %c6_i32_31 = arith.constant 6 : i32
    %248 = vector.broadcast %c6_i32_31 : i32 to vector<4x1xi32>
    %249 = arith.cmpi sgt, %0, %248 : vector<4x1xi32>
    %250 = vector.shape_cast %249 : vector<4x1xi1> to vector<4x1xi1>
    %251 = vector.broadcast %250 : vector<4x1xi1> to vector<4x16xi1>
    %252 = arith.select %251, %247, %217 : vector<4x16xi1>, vector<4x16xf32>
    %253 = vector.shape_cast %249 : vector<4x1xi1> to vector<4x1xi1>
    %254 = vector.broadcast %253 : vector<4x1xi1> to vector<4x16xi1>
    %255 = arith.select %254, %245, %220 : vector<4x16xi1>, vector<4x16xf32>
    %c7_i32 = arith.constant 7 : i32
    %256 = vector.broadcast %c7_i32 : i32 to vector<4x1xi32>
    %257 = arith.cmpi eq, %0, %256 : vector<4x1xi32>
    %258 = vector.extract_strided_slice %227 {offsets = [0, 64], sizes = [4, 64], strides = [1, 1]} : vector<4x128xf32> to vector<4x64xf32>
    %259 = vector.shape_cast %257 : vector<4x1xi1> to vector<4x1xi1>
    %260 = vector.broadcast %259 : vector<4x1xi1> to vector<4x64xi1>
    %261 = arith.select %260, %258, %226 : vector<4x64xi1>, vector<4x64xf32>
    %262 = vector.extract_strided_slice %7 {offsets = [28, 0], sizes = [4, 128], strides = [1, 1]} : vector<32x128xf32> to vector<4x128xf32>
    %263 = vector.extract_strided_slice %262 {offsets = [0, 0], sizes = [4, 64], strides = [1, 1]} : vector<4x128xf32> to vector<4x64xf32>
    %264 = arith.truncf %252 : vector<4x16xf32> to vector<4x16xbf16>
    %cst_32 = arith.constant dense<0.000000e+00> : vector<4x64xf32>
    %265 = tpu.matmul %264, %1, %cst_32 {dimension_numbers = #tpu.dot_dimension_numbers<[1], [0], [0], [1], [0, 0, 1, 1], [], []>} : vector<4x16xbf16>, vector<16x64xbf16>, vector<4x64xf32> -> vector<4x64xf32>
    %266 = arith.addf %263, %265 : vector<4x64xf32>
    %267 = math.tanh %266 : vector<4x64xf32>
    %268 = arith.negf %266 : vector<4x64xf32>
    %269 = math.exp %268 : vector<4x64xf32>
    %cst_33 = arith.constant 1.000000e+00 : f32
    %270 = vector.broadcast %cst_33 : f32 to vector<4x64xf32>
    %271 = arith.addf %270, %269 : vector<4x64xf32>
    %272 = arith.divf %270, %271 : vector<4x64xf32>
    %273 = arith.select %13, %267, %272 : vector<4x64xi1>, vector<4x64xf32>
    %274 = vector.extract_strided_slice %273 {offsets = [0, 0], sizes = [4, 16], strides = [1, 1]} : vector<4x64xf32> to vector<4x16xf32>
    %275 = vector.extract_strided_slice %273 {offsets = [0, 16], sizes = [4, 16], strides = [1, 1]} : vector<4x64xf32> to vector<4x16xf32>
    %276 = vector.extract_strided_slice %273 {offsets = [0, 32], sizes = [4, 16], strides = [1, 1]} : vector<4x64xf32> to vector<4x16xf32>
    %277 = vector.extract_strided_slice %273 {offsets = [0, 48], sizes = [4, 16], strides = [1, 1]} : vector<4x64xf32> to vector<4x16xf32>
    %278 = arith.mulf %275, %255 : vector<4x16xf32>
    %279 = arith.mulf %274, %276 : vector<4x16xf32>
    %280 = arith.addf %278, %279 : vector<4x16xf32>
    %281 = math.tanh %280 : vector<4x16xf32>
    %282 = arith.mulf %277, %281 : vector<4x16xf32>
    %c7_i32_34 = arith.constant 7 : i32
    %283 = vector.broadcast %c7_i32_34 : i32 to vector<4x1xi32>
    %284 = arith.cmpi sgt, %0, %283 : vector<4x1xi32>
    %285 = vector.shape_cast %284 : vector<4x1xi1> to vector<4x1xi1>
    %286 = vector.broadcast %285 : vector<4x1xi1> to vector<4x16xi1>
    %287 = arith.select %286, %282, %252 : vector<4x16xi1>, vector<4x16xf32>
    %c8_i32 = arith.constant 8 : i32
    %288 = vector.broadcast %c8_i32 : i32 to vector<4x1xi32>
    %289 = arith.cmpi eq, %0, %288 : vector<4x1xi32>
    %290 = vector.extract_strided_slice %262 {offsets = [0, 64], sizes = [4, 64], strides = [1, 1]} : vector<4x128xf32> to vector<4x64xf32>
    %291 = vector.shape_cast %289 : vector<4x1xi1> to vector<4x1xi1>
    %292 = vector.broadcast %291 : vector<4x1xi1> to vector<4x64xi1>
    %293 = arith.select %292, %290, %261 : vector<4x64xi1>, vector<4x64xf32>
    %294 = math.tanh %293 : vector<4x64xf32>
    %295 = arith.negf %293 : vector<4x64xf32>
    %296 = math.exp %295 : vector<4x64xf32>
    %cst_35 = arith.constant 1.000000e+00 : f32
    %297 = vector.broadcast %cst_35 : f32 to vector<4x64xf32>
    %298 = arith.addf %297, %296 : vector<4x64xf32>
    %299 = arith.divf %297, %298 : vector<4x64xf32>
    %300 = arith.select %13, %294, %299 : vector<4x64xi1>, vector<4x64xf32>
    %301 = vector.extract_strided_slice %300 {offsets = [0, 0], sizes = [4, 16], strides = [1, 1]} : vector<4x64xf32> to vector<4x16xf32>
    %302 = vector.extract_strided_slice %300 {offsets = [0, 32], sizes = [4, 16], strides = [1, 1]} : vector<4x64xf32> to vector<4x16xf32>
    %303 = vector.extract_strided_slice %300 {offsets = [0, 48], sizes = [4, 16], strides = [1, 1]} : vector<4x64xf32> to vector<4x16xf32>
    %304 = arith.mulf %301, %302 : vector<4x16xf32>
    %305 = math.tanh %304 : vector<4x16xf32>
    %306 = arith.mulf %303, %305 : vector<4x16xf32>
    %307 = arith.truncf %287 : vector<4x16xf32> to vector<4x16xbf16>
    %c0_36 = arith.constant 0 : index
    %c0_37 = arith.constant 0 : index
    %308 = vector.load %arg5[%c0_36, %c0_37] : memref<16x128xbf16, #tpu.memory_space<vmem>>, vector<16x128xbf16>
    %cst_38 = arith.constant dense<0.000000e+00> : vector<4x128xf32>
    %309 = tpu.matmul %307, %308, %cst_38 {dimension_numbers = #tpu.dot_dimension_numbers<[1], [0], [0], [1], [0, 0, 1, 1], [], []>} : vector<4x16xbf16>, vector<16x128xbf16>, vector<4x128xf32> -> vector<4x128xf32>
    %310 = arith.truncf %306 : vector<4x16xf32> to vector<4x16xbf16>
    %c0_39 = arith.constant 0 : index
    %c0_40 = arith.constant 0 : index
    %311 = vector.load %arg6[%c0_39, %c0_40] : memref<16x128xbf16, #tpu.memory_space<vmem>>, vector<16x128xbf16>
    %cst_41 = arith.constant dense<0.000000e+00> : vector<4x128xf32>
    %312 = tpu.matmul %310, %311, %cst_41 {dimension_numbers = #tpu.dot_dimension_numbers<[1], [0], [0], [1], [0, 0, 1, 1], [], []>} : vector<4x16xbf16>, vector<16x128xbf16>, vector<4x128xf32> -> vector<4x128xf32>
    %313 = arith.addf %309, %312 : vector<4x128xf32>
    %c0_42 = arith.constant 0 : index
    %c0_43 = arith.constant 0 : index
    %314 = vector.load %arg7[%c0_42, %c0_43] : memref<1x128xf32, #tpu.memory_space<vmem>>, vector<1x128xf32>
    %315 = vector.broadcast %314 : vector<1x128xf32> to vector<4x128xf32>
    %316 = arith.addf %313, %315 : vector<4x128xf32>
    %c0_44 = arith.constant 0 : index
    %c0_45 = arith.constant 0 : index
    %317 = vector.load %arg8[%c0_44, %c0_45] : memref<4x128xf32, #tpu.memory_space<vmem>>, vector<4x128xf32>
    tpu.vector_store %arg8[%c0_44, %c0_45], %316 {strides = array<i32>} : memref<4x128xf32, #tpu.memory_space<vmem>>, vector<4x128xf32>,
    return
  }
}

</mosaic_0001>

<llo_original>
// kernel: tpu_custom_call.1
$region0: #{tpu_custom_call.1}
  #allocation0 [shape = 'u32[]', space=smem, size = 0x4, offset = 0x4, fixed_abs, tag = 'smem constant byte address 0x4 - core index']
  #allocation1 [shape = 'u32[144,128]{1,0:T(1,128)}', space=vmem, size = 0x12000, scoped, tag = 'internal scratch']
  %s0 = inlined_call_operand.vmem [shape: bf16[32,8], index: 0, kind: input, shape index: {}]
  %s1 = inlined_call_operand.vmem [shape: s32[4,1], index: 1, kind: input, shape index: {}]
  %s2 = inlined_call_operand.vmem [shape: bf16[8,128], index: 2, kind: input, shape index: {}]
  %s3 = inlined_call_operand.vmem [shape: f32[1,128], index: 3, kind: input, shape index: {}]
  %s4 = inlined_call_operand.vmem [shape: bf16[16,64], index: 4, kind: input, shape index: {}]
  %s5 = inlined_call_operand.vmem [shape: bf16[16,128], index: 5, kind: input, shape index: {}]
  %s6 = inlined_call_operand.vmem [shape: bf16[16,128], index: 6, kind: input, shape index: {}]
  %s7 = inlined_call_operand.vmem [shape: f32[1,128], index: 7, kind: input, shape index: {}]
  %s8 = inlined_call_operand.hbm [shape: f32[4,128], index: 8, kind: output, shape index: {}]
  %s9 = sld [smem:[#allocation0]]
  $region42: #{tpu_custom_call.1} parent=0
    _
  %s11 = ssub.s32 1, %s9
  %s12 = scalar_select 0, %s11, %s9
  $region1: #{tpu_custom_call.1} parent=0
    #allocation2 [shape = 'u8[2048]{0}', space=vmem, size = 0x800, scoped, tag = 'output window, operand 0, single buffered']
    #allocation3 [shape = 's32[1]{0}', space=sflag, size = 0x4, scoped, tag = 'scoped memory for tpu_custom_call.1']
    %13 = vsyncpa [#allocation3], 0
    // Predicated region
    $region2: #{tpu_custom_call.1} parent=1 // pred_check
      _
    $region3: #{tpu_custom_call.1} parent=1 // pred_check_branch
      %15 = sbr.rel (0) target = $region5
    $region4: #{tpu_custom_call.1} parent=1 // pred_region
      _
    $region5: #{tpu_custom_call.1} parent=1 // pred_fallthru
      _
    // Predicated region
    $region6: #{tpu_custom_call.1} parent=1 // pred_check
      _
    $region7: #{tpu_custom_call.1} parent=1 // pred_check_branch
      %17 = sbr.rel (0) target = $region9
    $region8: #{tpu_custom_call.1} parent=1 // pred_region
      _
    $region9: #{tpu_custom_call.1} parent=1 // pred_fallthru
      _
    // Predicated region
    $region10: #{tpu_custom_call.1} parent=1 // pred_check
      _
    $region11: #{tpu_custom_call.1} parent=1 // pred_check_branch
      %19 = sbr.rel (0) target = $region13
    $region12: #{tpu_custom_call.1} parent=1 // pred_region
      _
    $region13: #{tpu_custom_call.1} parent=1 // pred_fallthru
      _
    // Predicated region
    $region14: #{tpu_custom_call.1} parent=1 // pred_check
      _
    $region15: #{tpu_custom_call.1} parent=1 // pred_check_branch
      %21 = sbr.rel (0) target = $region17
    $region16: #{tpu_custom_call.1} parent=1 // pred_region
      _
    $region17: #{tpu_custom_call.1} parent=1 // pred_fallthru
      _
    // Predicated region
    $region18: #{tpu_custom_call.1} parent=1 // pred_check
      _
    $region19: #{tpu_custom_call.1} parent=1 // pred_check_branch
      %23 = sbr.rel (0) target = $region21
    $region20: #{tpu_custom_call.1} parent=1 // pred_region
      _
    $region21: #{tpu_custom_call.1} parent=1 // pred_fallthru
      _
    // Predicated region
    $region22: #{tpu_custom_call.1} parent=1 // pred_check
      _
    $region23: #{tpu_custom_call.1} parent=1 // pred_check_branch
      %25 = sbr.rel (0) target = $region25
    $region24: #{tpu_custom_call.1} parent=1 // pred_region
      _
    $region25: #{tpu_custom_call.1} parent=1 // pred_fallthru
      _
    // Predicated region
    $region26: #{tpu_custom_call.1} parent=1 // pred_check
      _
    $region27: #{tpu_custom_call.1} parent=1 // pred_check_branch
      %27 = sbr.rel (0) target = $region29
    $region28: #{tpu_custom_call.1} parent=1 // pred_region
      _
    $region29: #{tpu_custom_call.1} parent=1 // pred_fallthru
      _
    // Predicated region
    $region30: #{tpu_custom_call.1} parent=1 // pred_check
      _
    $region31: #{tpu_custom_call.1} parent=1 // pred_check_branch
      %29 = sbr.rel (0) target = $region33
    $region32: #{tpu_custom_call.1} parent=1 // pred_region
      _
    $region33: #{tpu_custom_call.1} parent=1 // pred_fallthru
      _
    %v31 = vld [vmem:[%s1] sm:$0xf]
    %v32 = vld [vmem:[%s4] sm:$0xf]
    %v33 = vld [vmem:[%s4 + $0x4] sm:$0xf]
    %v34 = vld [vmem:[%s0] sm:$0xf]
    %v35 = vld [vmem:[%s0 + $0x4] sm:$0xf]
    %v36 = vld [vmem:[%s0 + $0x8] sm:$0xf]
    %v37 = vld [vmem:[%s0 + $0xc] sm:$0xf]
    %v38 = vld [vmem:[%s2] sm:$0xf]
    %v39 = vld [vmem:[%s3] sm:$0x1]
    %v41 = vlaneseq
    %v42 = vshrl.u32 %v41, 7
    %v43 = vsub.s32 0, %v42
    %v44 = vrot.slane %v39, %v43
    %v50 = vunpack.c.l.b16 %v34
    %v51 = vunpack.c.l.b16 %v35
    %v52 = vunpack.c.l.b16 %v36
    %v53 = vunpack.c.l.b16 %v37
    %v54 = vpack.c.b16 %v51, %v50
    %v55 = vpack.c.b16 %v53, %v52
    %vm56 = vcmask 64512
    %v58 = vsel %vm56, %v54, 0
    %v61 = vsel %vm56, %v55, 0
    %vm63 = vcmask 1043456
    %v65 = vsel %vm63, %v38, 0
    %67 = vmatprep.subr.bf16.mxu0 0
    %68 = vmatpush1.bf16.msra.mxu0 %v65
    %69 = vmatprep.subr.bf16.mxu0 0
    %70 = vmatpush1.bf16.msra.mxu0 0
    %71 = vmatprep.subr.bf16.mxu0 0
    %72 = vmatpush1.bf16.msra.mxu0 0
    %73 = vmatprep.subr.bf16.mxu0 0
    %74 = vmatpush1.bf16.msra.mxu0 0
    %75 = vmatprep.subr.bf16.mxu0 0
    %76 = vmatpush1.bf16.msra.mxu0 0
    %77 = vmatprep.subr.bf16.mxu0 0
    %78 = vmatpush1.bf16.msra.mxu0 0
    %79 = vmatprep.subr.bf16.mxu0 0
    %80 = vmatpush1.bf16.msra.mxu0 0
    %81 = vmatprep.subr.bf16.mxu0 0
    %82 = vmatpush1.bf16.msra.mxu0 0
    %83 = vmatprep.subr.bf16.mxu0 0
    %84 = vmatpush1.bf16.msra.mxu0 0
    %85 = vmatprep.subr.bf16.mxu0 0
    %86 = vmatpush1.bf16.msra.mxu0 0
    %87 = vmatprep.subr.bf16.mxu0 0
    %88 = vmatpush1.bf16.msra.mxu0 0
    %89 = vmatprep.subr.bf16.mxu0 0
    %90 = vmatpush1.bf16.msra.mxu0 0
    %91 = vmatprep.subr.bf16.mxu0 0
    %92 = vmatpush1.bf16.msra.mxu0 0
    %93 = vmatprep.subr.bf16.mxu0 0
    %94 = vmatpush1.bf16.msra.mxu0 0
    %95 = vmatprep.subr.bf16.mxu0 0
    %96 = vmatpush1.bf16.msra.mxu0 0
    %97 = vmatprep.subr.bf16.mxu0 0
    %98 = vmatpush1.bf16.msra.mxu0 0
    %99 = vmatprep.mubr.bf16.mxu0 0
    %100 = vmatmul.mubr.bf16.gmra.mrb[0].mxu0 %v58
    %v101 = vpop.f32.mrb[0].mxu0
    %v102 = vadd.f32 %v44, %v101
    %v103 = vpop.f32.mrb[0].mxu0
    %v104 = vpop.f32.mrb[0].mxu0
    %v105 = vadd.f32 %v44, %v104
    %v106 = vpop.f32.mrb[0].mxu0
    %107 = vmatprep.mubr.bf16.mxu0 0
    %108 = vmatmul.mubr.bf16.gmra.mrb[0].mxu0 %v61
    %v109 = vpop.f32.mrb[0].mxu0
    %v110 = vadd.f32 %v44, %v109
    %v111 = vpop.f32.mrb[0].mxu0
    %v112 = vpop.f32.mrb[0].mxu0
    %v113 = vadd.f32 %v44, %v112
    %v114 = vpop.f32.mrb[0].mxu0
    %115 = vdwg.mxu0
    %v116 = vlaneseq
    %v117 = vand.u32 %v116, 127
    %vm118 = vcmp.ge.s32.totalorder %v117, 32
    %vm119 = vcmp.lt.s32.totalorder %v117, 48
    %vm120 = vmand %vm118, %vm119
    %v123 = vunpack.c.l.b16 %v32
    %v124 = vunpack.c.l.b16 %v33
    %v125 = vpack.c.b16 %v124, %v123
    %vm127 = vcmask 130048
    %v129 = vsel %vm127, 0, 0
    %131 = vmatprep.subr.bf16.mxu0 0
    %132 = vmatpush1.bf16.msra.mxu0 %v125
    %133 = vmatprep.subr.bf16.mxu0 0
    %134 = vmatpush1.bf16.msra.mxu0 0
    %135 = vmatprep.subr.bf16.mxu0 0
    %136 = vmatpush1.bf16.msra.mxu0 0
    %137 = vmatprep.subr.bf16.mxu0 0
    %138 = vmatpush1.bf16.msra.mxu0 0
    %139 = vmatprep.subr.bf16.mxu0 0
    %140 = vmatpush1.bf16.msra.mxu0 0
    %141 = vmatprep.subr.bf16.mxu0 0
    %142 = vmatpush1.bf16.msra.mxu0 0
    %143 = vmatprep.subr.bf16.mxu0 0
    %144 = vmatpush1.bf16.msra.mxu0 0
    %145 = vmatprep.subr.bf16.mxu0 0
    %146 = vmatpush1.bf16.msra.mxu0 0
    %147 = vmatprep.subr.bf16.mxu0 0
    %148 = vmatpush1.bf16.msra.mxu0 0
    %149 = vmatprep.subr.bf16.mxu0 0
    %150 = vmatpush1.bf16.msra.mxu0 0
    %151 = vmatprep.subr.bf16.mxu0 0
    %152 = vmatpush1.bf16.msra.mxu0 0
    %153 = vmatprep.subr.bf16.mxu0 0
    %154 = vmatpush1.bf16.msra.mxu0 0
    %155 = vmatprep.subr.bf16.mxu0 0
    %156 = vmatpush1.bf16.msra.mxu0 0
    %157 = vmatprep.subr.bf16.mxu0 0
    %158 = vmatpush1.bf16.msra.mxu0 0
    %159 = vmatprep.subr.bf16.mxu0 0
    %160 = vmatpush1.bf16.msra.mxu0 0
    %161 = vmatprep.subr.bf16.mxu0 0
    %162 = vmatpush1.bf16.msra.mxu0 0
    %163 = vmatprep.mubr.bf16.mxu0 0
    %164 = vmatmul.mubr.bf16.gmra.mrb[0].mxu0 %v129
    %v165 = vpop.f32.mrb[0].mxu0
    %v166 = vadd.f32 0.0, %v165
    %v167 = vpop.f32.mrb[0].mxu0
    %v168 = vpop.f32.mrb[0].mxu0
    %v169 = vpop.f32.mrb[0].mxu0
    %170 = vdwg.mxu0
    %v171 = vadd.f32 %v102, %v166
    %v172 = vtanh.pop %v171
    %v173 = vxor.u32 %v171, 2147483648
    %v174 = vmul.f32 %v173, 1.442695
    %v175 = vpow.pop %v174
    %v176 = vadd.f32 %v175, 1.0
    %v177 = vrcp.pop %v176
    %v178 = vmul.f32 1.0, %v177
    %v179 = vsel %vm120, %v172, %v178
    %v180 = vmul.f32 %v179, 0.0
    %182 = vrot.lane.b32.xlu0 %v179, 96
    %v183 = vpop.permute.xlu0 %182
    %v185 = vmul.f32 %v179, %v183
    %187 = vrot.lane.b32.xlu0 %v185, 16
    %v188 = vpop.permute.xlu0 %187
    %v190 = vadd.f32 %v180, %v188
    %v191 = vtanh.pop %v190
    %193 = vrot.lane.b32.xlu0 %v191, 32
    %v194 = vpop.permute.xlu0 %193
    %v196 = vmul.f32 %v179, %v194
    %vm197 = vcmp.gt.s32.totalorder %v31, 0
    %v198 = vsel %vm197, 1, 0
    %199 = vset.pattern.permute.xlu0 0
    %200 = vperm.xlu0 %199, %v198
    %v201 = vpop.permute.xlu0 %200
    %vm202 = vcmp.eq.s32.totalorder %v201, 1
    %v203 = vsel %vm202, %v196, 0.0
    %v204 = vsel %vm202, %v190, 0.0
    %vm205 = vcmp.eq.s32.totalorder %v31, 1
    %v206 = vsel %vm205, 1, 0
    %207 = vset.pattern.permute.xlu0 0
    %208 = vperm.xlu0 %207, %v206
    %v209 = vpop.permute.xlu0 %208
    %vm210 = vcmp.eq.s32.totalorder %v209, 1
    %v211 = vsel %vm210, %v102, 0.0
    %v212 = vpack.c.bf16 %v203, %v203
    %214 = vrot.lane.b32.xlu0 %v212, 80
    %v215 = vpop.permute.xlu0 %214
    %v217 = vsel %vm127, %v215, 0
    %219 = vmatprep.subr.bf16.mxu0 0
    %220 = vmatpush1.bf16.msra.mxu0 %v125
    %221 = vmatprep.subr.bf16.mxu0 0
    %222 = vmatpush1.bf16.msra.mxu0 0
    %223 = vmatprep.subr.bf16.mxu0 0
    %224 = vmatpush1.bf16.msra.mxu0 0
    %225 = vmatprep.subr.bf16.mxu0 0
    %226 = vmatpush1.bf16.msra.mxu0 0
    %227 = vmatprep.subr.bf16.mxu0 0
    %228 = vmatpush1.bf16.msra.mxu0 0
    %229 = vmatprep.subr.bf16.mxu0 0
    %230 = vmatpush1.bf16.msra.mxu0 0
    %231 = vmatprep.subr.bf16.mxu0 0
    %232 = vmatpush1.bf16.msra.mxu0 0
    %233 = vmatprep.subr.bf16.mxu0 0
    %234 = vmatpush1.bf16.msra.mxu0 0
    %235 = vmatprep.subr.bf16.mxu0 0
    %236 = vmatpush1.bf16.msra.mxu0 0
    %237 = vmatprep.subr.bf16.mxu0 0
    %238 = vmatpush1.bf16.msra.mxu0 0
    %239 = vmatprep.subr.bf16.mxu0 0
    %240 = vmatpush1.bf16.msra.mxu0 0
    %241 = vmatprep.subr.bf16.mxu0 0
    %242 = vmatpush1.bf16.msra.mxu0 0
    %243 = vmatprep.subr.bf16.mxu0 0
    %244 = vmatpush1.bf16.msra.mxu0 0
    %245 = vmatprep.subr.bf16.mxu0 0
    %246 = vmatpush1.bf16.msra.mxu0 0
    %247 = vmatprep.subr.bf16.mxu0 0
    %248 = vmatpush1.bf16.msra.mxu0 0
    %249 = vmatprep.subr.bf16.mxu0 0
    %250 = vmatpush1.bf16.msra.mxu0 0
    %251 = vmatprep.mubr.bf16.mxu0 0
    %252 = vmatmul.mubr.bf16.gmra.mrb[0].mxu0 %v217
    %v253 = vpop.f32.mrb[0].mxu0
    %v254 = vadd.f32 0.0, %v253
    %v255 = vpop.f32.mrb[0].mxu0
    %v256 = vpop.f32.mrb[0].mxu0
    %v257 = vpop.f32.mrb[0].mxu0
    %258 = vdwg.mxu0
    %v260 = vrot.slane %v254, 4
    %v262 = vadd.f32 %v102, %v260
    %v263 = vtanh.pop %v262
    %v264 = vxor.u32 %v262, 2147483648
    %v265 = vmul.f32 %v264, 1.442695
    %v266 = vpow.pop %v265
    %v267 = vadd.f32 %v266, 1.0
    %v268 = vrcp.pop %v267
    %v269 = vmul.f32 1.0, %v268
    %v270 = vsel %vm120, %v263, %v269
    %v272 = vrot.slane %v204, 4
    %v274 = vmul.f32 %v270, %v272
    %276 = vrot.lane.b32.xlu0 %v270, 96
    %v277 = vpop.permute.xlu0 %276
    %v279 = vmul.f32 %v270, %v277
    %281 = vrot.lane.b32.xlu0 %v279, 16
    %v282 = vpop.permute.xlu0 %281
    %v284 = vadd.f32 %v274, %v282
    %v285 = vtanh.pop %v284
    %287 = vrot.lane.b32.xlu0 %v285, 32
    %v288 = vpop.permute.xlu0 %287
    %v290 = vmul.f32 %v270, %v288
    %vm291 = vcmp.gt.s32.totalorder %v31, 1
    %v292 = vsel %vm291, 1, 0
    %293 = vset.pattern.permute.xlu0 0
    %294 = vperm.xlu0 %293, %v292
    %v295 = vpop.permute.xlu0 %294
    %vm296 = vcmp.eq.s32.totalorder %v295, 1
    %v298 = vrot.slane %v290, 4
    %299 = vrot.lane.b32.xlu0 %v298, 80
    %v300 = vpop.permute.xlu0 %299
    %303 = vrot.lane.b32.xlu0 %v203, 80
    %v304 = vpop.permute.xlu0 %303
    %v306 = vsel %vm296, %v300, %v304
    %v308 = vrot.slane %v284, 4
    %309 = vrot.lane.b32.xlu0 %v308, 112
    %v310 = vpop.permute.xlu0 %309
    %312 = vrot.lane.b32.xlu0 %v204, 112
    %v313 = vpop.permute.xlu0 %312
    %v315 = vsel %vm296, %v310, %v313
    %vm316 = vcmp.eq.s32.totalorder %v31, 2
    %v317 = vsel %vm316, 1, 0
    %318 = vset.pattern.permute.xlu0 0
    %319 = vperm.xlu0 %318, %v317
    %v320 = vpop.permute.xlu0 %319
    %vm321 = vcmp.eq.s32.totalorder %v320, 1
    %v323 = vrot.slane %v102, 4
    %324 = vrot.lane.b32.xlu0 %v323, 64
    %v325 = vpop.permute.xlu0 %324
    %328 = vrot.lane.b32.xlu0 %v211, 64
    %v329 = vpop.permute.xlu0 %328
    %v331 = vsel %vm321, %v325, %v329
    %v332 = vpack.c.bf16 %v306, %v306
    %v334 = vsel %vm127, %v332, 0
    %336 = vmatprep.subr.bf16.mxu0 0
    %337 = vmatpush1.bf16.msra.mxu0 %v125
    %338 = vmatprep.subr.bf16.mxu0 0
    %339 = vmatpush1.bf16.msra.mxu0 0
    %340 = vmatprep.subr.bf16.mxu0 0
    %341 = vmatpush1.bf16.msra.mxu0 0
    %342 = vmatprep.subr.bf16.mxu0 0
    %343 = vmatpush1.bf16.msra.mxu0 0
    %344 = vmatprep.subr.bf16.mxu0 0
    %345 = vmatpush1.bf16.msra.mxu0 0
    %346 = vmatprep.subr.bf16.mxu0 0
    %347 = vmatpush1.bf16.msra.mxu0 0
    %348 = vmatprep.subr.bf16.mxu0 0
    %349 = vmatpush1.bf16.msra.mxu0 0
    %350 = vmatprep.subr.bf16.mxu0 0
    %351 = vmatpush1.bf16.msra.mxu0 0
    %352 = vmatprep.subr.bf16.mxu0 0
    %353 = vmatpush1.bf16.msra.mxu0 0
    %354 = vmatprep.subr.bf16.mxu0 0
    %355 = vmatpush1.bf16.msra.mxu0 0
    %356 = vmatprep.subr.bf16.mxu0 0
    %357 = vmatpush1.bf16.msra.mxu0 0
    %358 = vmatprep.subr.bf16.mxu0 0
    %359 = vmatpush1.bf16.msra.mxu0 0
    %360 = vmatprep.subr.bf16.mxu0 0
    %361 = vmatpush1.bf16.msra.mxu0 0
    %362 = vmatprep.subr.bf16.mxu0 0
    %363 = vmatpush1.bf16.msra.mxu0 0
    %364 = vmatprep.subr.bf16.mxu0 0
    %365 = vmatpush1.bf16.msra.mxu0 0
    %366 = vmatprep.subr.bf16.mxu0 0
    %367 = vmatpush1.bf16.msra.mxu0 0
    %368 = vmatprep.mubr.bf16.mxu0 0
    %369 = vmatmul.mubr.bf16.gmra.mrb[0].mxu0 %v334
    %v370 = vpop.f32.mrb[0].mxu0
    %v371 = vadd.f32 0.0, %v370
    %v372 = vpop.f32.mrb[0].mxu0
    %v373 = vpop.f32.mrb[0].mxu0
    %v374 = vpop.f32.mrb[0].mxu0
    %375 = vdwg.mxu0
    %v376 = vadd.f32 %v105, %v371
    %v377 = vtanh.pop %v376
    %v378 = vxor.u32 %v376, 2147483648
    %v379 = vmul.f32 %v378, 1.442695
    %v380 = vpow.pop %v379
    %v381 = vadd.f32 %v380, 1.0
    %v382 = vrcp.pop %v381
    %v383 = vmul.f32 1.0, %v382
    %v384 = vsel %vm120, %v377, %v383
    %386 = vrot.lane.b32.xlu0 %v315, 16
    %v387 = vpop.permute.xlu0 %386
    %v389 = vmul.f32 %v384, %v387
    %391 = vrot.lane.b32.xlu0 %v384, 96
    %v392 = vpop.permute.xlu0 %391
    %v394 = vmul.f32 %v384, %v392
    %396 = vrot.lane.b32.xlu0 %v394, 16
    %v397 = vpop.permute.xlu0 %396
    %v399 = vadd.f32 %v389, %v397
    %v400 = vtanh.pop %v399
    %402 = vrot.lane.b32.xlu0 %v400, 32
    %v403 = vpop.permute.xlu0 %402
    %v405 = vmul.f32 %v384, %v403
    %vm406 = vcmp.gt.s32.totalorder %v31, 2
    %v407 = vsel %vm406, 1, 0
    %408 = vset.pattern.permute.xlu0 0
    %409 = vperm.xlu0 %408, %v407
    %v410 = vpop.permute.xlu0 %409
    %vm411 = vcmp.eq.s32.totalorder %v410, 1
    %413 = vrot.lane.b32.xlu0 %v306, 48
    %v414 = vpop.permute.xlu0 %413
    %v416 = vsel %vm411, %v405, %v414
    %v417 = vsel %vm411, %v399, %v387
    %vm418 = vcmp.eq.s32.totalorder %v31, 3
    %v419 = vsel %vm418, 1, 0
    %420 = vset.pattern.permute.xlu0 0
    %421 = vperm.xlu0 %420, %v419
    %v422 = vpop.permute.xlu0 %421
    %vm423 = vcmp.eq.s32.totalorder %v422, 1
    %425 = vrot.lane.b32.xlu0 %v331, 64
    %v426 = vpop.permute.xlu0 %425
    %v428 = vsel %vm423, %v105, %v426
    %v429 = vpack.c.bf16 %v416, %v416
    %431 = vrot.lane.b32.xlu0 %v429, 80
    %v432 = vpop.permute.xlu0 %431
    %v434 = vsel %vm127, %v432, 0
    %436 = vmatprep.subr.bf16.mxu0 0
    %437 = vmatpush1.bf16.msra.mxu0 %v125
    %438 = vmatprep.subr.bf16.mxu0 0
    %439 = vmatpush1.bf16.msra.mxu0 0
    %440 = vmatprep.subr.bf16.mxu0 0
    %441 = vmatpush1.bf16.msra.mxu0 0
    %442 = vmatprep.subr.bf16.mxu0 0
    %443 = vmatpush1.bf16.msra.mxu0 0
    %444 = vmatprep.subr.bf16.mxu0 0
    %445 = vmatpush1.bf16.msra.mxu0 0
    %446 = vmatprep.subr.bf16.mxu0 0
    %447 = vmatpush1.bf16.msra.mxu0 0
    %448 = vmatprep.subr.bf16.mxu0 0
    %449 = vmatpush1.bf16.msra.mxu0 0
    %450 = vmatprep.subr.bf16.mxu0 0
    %451 = vmatpush1.bf16.msra.mxu0 0
    %452 = vmatprep.subr.bf16.mxu0 0
    %453 = vmatpush1.bf16.msra.mxu0 0
    %454 = vmatprep.subr.bf16.mxu0 0
    %455 = vmatpush1.bf16.msra.mxu0 0
    %456 = vmatprep.subr.bf16.mxu0 0
    %457 = vmatpush1.bf16.msra.mxu0 0
    %458 = vmatprep.subr.bf16.mxu0 0
    %459 = vmatpush1.bf16.msra.mxu0 0
    %460 = vmatprep.subr.bf16.mxu0 0
    %461 = vmatpush1.bf16.msra.mxu0 0
    %462 = vmatprep.subr.bf16.mxu0 0
    %463 = vmatpush1.bf16.msra.mxu0 0
    %464 = vmatprep.subr.bf16.mxu0 0
    %465 = vmatpush1.bf16.msra.mxu0 0
    %466 = vmatprep.subr.bf16.mxu0 0
    %467 = vmatpush1.bf16.msra.mxu0 0
    %468 = vmatprep.mubr.bf16.mxu0 0
    %469 = vmatmul.mubr.bf16.gmra.mrb[0].mxu0 %v434
    %v470 = vpop.f32.mrb[0].mxu0
    %v471 = vadd.f32 0.0, %v470
    %v472 = vpop.f32.mrb[0].mxu0
    %v473 = vpop.f32.mrb[0].mxu0
    %v474 = vpop.f32.mrb[0].mxu0
    %475 = vdwg.mxu0
    %v477 = vrot.slane %v471, 4
    %v479 = vadd.f32 %v105, %v477
    %v480 = vtanh.pop %v479
    %v481 = vxor.u32 %v479, 2147483648
    %v482 = vmul.f32 %v481, 1.442695
    %v483 = vpow.pop %v482
    %v484 = vadd.f32 %v483, 1.0
    %v485 = vrcp.pop %v484
    %v486 = vmul.f32 1.0, %v485
    %v487 = vsel %vm120, %v480, %v486
    %v489 = vrot.slane %v417, 4
    %v491 = vmul.f32 %v487, %v489
    %493 = vrot.lane.b32.xlu0 %v487, 96
    %v494 = vpop.permute.xlu0 %493
    %v496 = vmul.f32 %v487, %v494
    %498 = vrot.lane.b32.xlu0 %v496, 16
    %v499 = vpop.permute.xlu0 %498
    %v501 = vadd.f32 %v491, %v499
    %v502 = vtanh.pop %v501
    %504 = vrot.lane.b32.xlu0 %v502, 32
    %v505 = vpop.permute.xlu0 %504
    %v507 = vmul.f32 %v487, %v505
    %vm508 = vcmp.gt.s32.totalorder %v31, 3
    %v509 = vsel %vm508, 1, 0
    %510 = vset.pattern.permute.xlu0 0
    %511 = vperm.xlu0 %510, %v509
    %v512 = vpop.permute.xlu0 %511
    %vm513 = vcmp.eq.s32.totalorder %v512, 1
    %v515 = vrot.slane %v507, 4
    %516 = vrot.lane.b32.xlu0 %v515, 80
    %v517 = vpop.permute.xlu0 %516
    %520 = vrot.lane.b32.xlu0 %v416, 80
    %v521 = vpop.permute.xlu0 %520
    %v523 = vsel %vm513, %v517, %v521
    %v525 = vrot.slane %v501, 4
    %526 = vrot.lane.b32.xlu0 %v525, 112
    %v527 = vpop.permute.xlu0 %526
    %529 = vrot.lane.b32.xlu0 %v417, 112
    %v530 = vpop.permute.xlu0 %529
    %v532 = vsel %vm513, %v527, %v530
    %vm533 = vcmp.eq.s32.totalorder %v31, 4
    %v534 = vsel %vm533, 1, 0
    %535 = vset.pattern.permute.xlu0 0
    %536 = vperm.xlu0 %535, %v534
    %v537 = vpop.permute.xlu0 %536
    %vm538 = vcmp.eq.s32.totalorder %v537, 1
    %v540 = vrot.slane %v105, 4
    %541 = vrot.lane.b32.xlu0 %v540, 64
    %v542 = vpop.permute.xlu0 %541
    %545 = vrot.lane.b32.xlu0 %v428, 64
    %v546 = vpop.permute.xlu0 %545
    %v548 = vsel %vm538, %v542, %v546
    %v549 = vpack.c.bf16 %v523, %v523
    %v551 = vsel %vm127, %v549, 0
    %553 = vmatprep.subr.bf16.mxu0 0
    %554 = vmatpush1.bf16.msra.mxu0 %v125
    %555 = vmatprep.subr.bf16.mxu0 0
    %556 = vmatpush1.bf16.msra.mxu0 0
    %557 = vmatprep.subr.bf16.mxu0 0
    %558 = vmatpush1.bf16.msra.mxu0 0
    %559 = vmatprep.subr.bf16.mxu0 0
    %560 = vmatpush1.bf16.msra.mxu0 0
    %561 = vmatprep.subr.bf16.mxu0 0
    %562 = vmatpush1.bf16.msra.mxu0 0
    %563 = vmatprep.subr.bf16.mxu0 0
    %564 = vmatpush1.bf16.msra.mxu0 0
    %565 = vmatprep.subr.bf16.mxu0 0
    %566 = vmatpush1.bf16.msra.mxu0 0
    %567 = vmatprep.subr.bf16.mxu0 0
    %568 = vmatpush1.bf16.msra.mxu0 0
    %569 = vmatprep.subr.bf16.mxu0 0
    %570 = vmatpush1.bf16.msra.mxu0 0
    %571 = vmatprep.subr.bf16.mxu0 0
    %572 = vmatpush1.bf16.msra.mxu0 0
    %573 = vmatprep.subr.bf16.mxu0 0
    %574 = vmatpush1.bf16.msra.mxu0 0
    %575 = vmatprep.subr.bf16.mxu0 0
    %576 = vmatpush1.bf16.msra.mxu0 0
    %577 = vmatprep.subr.bf16.mxu0 0
    %578 = vmatpush1.bf16.msra.mxu0 0
    %579 = vmatprep.subr.bf16.mxu0 0
    %580 = vmatpush1.bf16.msra.mxu0 0
    %581 = vmatprep.subr.bf16.mxu0 0
    %582 = vmatpush1.bf16.msra.mxu0 0
    %583 = vmatprep.subr.bf16.mxu0 0
    %584 = vmatpush1.bf16.msra.mxu0 0
    %585 = vmatprep.mubr.bf16.mxu0 0
    %586 = vmatmul.mubr.bf16.gmra.mrb[0].mxu0 %v551
    %v587 = vpop.f32.mrb[0].mxu0
    %v588 = vadd.f32 0.0, %v587
    %v589 = vpop.f32.mrb[0].mxu0
    %v590 = vpop.f32.mrb[0].mxu0
    %v591 = vpop.f32.mrb[0].mxu0
    %592 = vdwg.mxu0
    %v593 = vadd.f32 %v110, %v588
    %v594 = vtanh.pop %v593
    %v595 = vxor.u32 %v593, 2147483648
    %v596 = vmul.f32 %v595, 1.442695
    %v597 = vpow.pop %v596
    %v598 = vadd.f32 %v597, 1.0
    %v599 = vrcp.pop %v598
    %v600 = vmul.f32 1.0, %v599
    %v601 = vsel %vm120, %v594, %v600
    %603 = vrot.lane.b32.xlu0 %v532, 16
    %v604 = vpop.permute.xlu0 %603
    %v606 = vmul.f32 %v601, %v604
    %608 = vrot.lane.b32.xlu0 %v601, 96
    %v609 = vpop.permute.xlu0 %608
    %v611 = vmul.f32 %v601, %v609
    %613 = vrot.lane.b32.xlu0 %v611, 16
    %v614 = vpop.permute.xlu0 %613
    %v616 = vadd.f32 %v606, %v614
    %v617 = vtanh.pop %v616
    %619 = vrot.lane.b32.xlu0 %v617, 32
    %v620 = vpop.permute.xlu0 %619
    %v622 = vmul.f32 %v601, %v620
    %vm623 = vcmp.gt.s32.totalorder %v31, 4
    %v624 = vsel %vm623, 1, 0
    %625 = vset.pattern.permute.xlu0 0
    %626 = vperm.xlu0 %625, %v624
    %v627 = vpop.permute.xlu0 %626
    %vm628 = vcmp.eq.s32.totalorder %v627, 1
    %630 = vrot.lane.b32.xlu0 %v523, 48
    %v631 = vpop.permute.xlu0 %630
    %v633 = vsel %vm628, %v622, %v631
    %v634 = vsel %vm628, %v616, %v604
    %vm635 = vcmp.eq.s32.totalorder %v31, 5
    %v636 = vsel %vm635, 1, 0
    %637 = vset.pattern.permute.xlu0 0
    %638 = vperm.xlu0 %637, %v636
    %v639 = vpop.permute.xlu0 %638
    %vm640 = vcmp.eq.s32.totalorder %v639, 1
    %642 = vrot.lane.b32.xlu0 %v548, 64
    %v643 = vpop.permute.xlu0 %642
    %v645 = vsel %vm640, %v110, %v643
    %v646 = vpack.c.bf16 %v633, %v633
    %648 = vrot.lane.b32.xlu0 %v646, 80
    %v649 = vpop.permute.xlu0 %648
    %v651 = vsel %vm127, %v649, 0
    %653 = vmatprep.subr.bf16.mxu0 0
    %654 = vmatpush1.bf16.msra.mxu0 %v125
    %655 = vmatprep.subr.bf16.mxu0 0
    %656 = vmatpush1.bf16.msra.mxu0 0
    %657 = vmatprep.subr.bf16.mxu0 0
    %658 = vmatpush1.bf16.msra.mxu0 0
    %659 = vmatprep.subr.bf16.mxu0 0
    %660 = vmatpush1.bf16.msra.mxu0 0
    %661 = vmatprep.subr.bf16.mxu0 0
    %662 = vmatpush1.bf16.msra.mxu0 0
    %663 = vmatprep.subr.bf16.mxu0 0
    %664 = vmatpush1.bf16.msra.mxu0 0
    %665 = vmatprep.subr.bf16.mxu0 0
    %666 = vmatpush1.bf16.msra.mxu0 0
    %667 = vmatprep.subr.bf16.mxu0 0
    %668 = vmatpush1.bf16.msra.mxu0 0
    %669 = vmatprep.subr.bf16.mxu0 0
    %670 = vmatpush1.bf16.msra.mxu0 0
    %671 = vmatprep.subr.bf16.mxu0 0
    %672 = vmatpush1.bf16.msra.mxu0 0
    %673 = vmatprep.subr.bf16.mxu0 0
    %674 = vmatpush1.bf16.msra.mxu0 0
    %675 = vmatprep.subr.bf16.mxu0 0
    %676 = vmatpush1.bf16.msra.mxu0 0
    %677 = vmatprep.subr.bf16.mxu0 0
    %678 = vmatpush1.bf16.msra.mxu0 0
    %679 = vmatprep.subr.bf16.mxu0 0
    %680 = vmatpush1.bf16.msra.mxu0 0
    %681 = vmatprep.subr.bf16.mxu0 0
    %682 = vmatpush1.bf16.msra.mxu0 0
    %683 = vmatprep.subr.bf16.mxu0 0
    %684 = vmatpush1.bf16.msra.mxu0 0
    %685 = vmatprep.mubr.bf16.mxu0 0
    %686 = vmatmul.mubr.bf16.gmra.mrb[0].mxu0 %v651
    %v687 = vpop.f32.mrb[0].mxu0
    %v688 = vadd.f32 0.0, %v687
    %v689 = vpop.f32.mrb[0].mxu0
    %v690 = vpop.f32.mrb[0].mxu0
    %v691 = vpop.f32.mrb[0].mxu0
    %692 = vdwg.mxu0
    %v694 = vrot.slane %v688, 4
    %v696 = vadd.f32 %v110, %v694
    %v697 = vtanh.pop %v696
    %v698 = vxor.u32 %v696, 2147483648
    %v699 = vmul.f32 %v698, 1.442695
    %v700 = vpow.pop %v699
    %v701 = vadd.f32 %v700, 1.0
    %v702 = vrcp.pop %v701
    %v703 = vmul.f32 1.0, %v702
    %v704 = vsel %vm120, %v697, %v703
    %v706 = vrot.slane %v634, 4
    %v708 = vmul.f32 %v704, %v706
    %710 = vrot.lane.b32.xlu0 %v704, 96
    %v711 = vpop.permute.xlu0 %710
    %v713 = vmul.f32 %v704, %v711
    %715 = vrot.lane.b32.xlu0 %v713, 16
    %v716 = vpop.permute.xlu0 %715
    %v718 = vadd.f32 %v708, %v716
    %v719 = vtanh.pop %v718
    %721 = vrot.lane.b32.xlu0 %v719, 32
    %v722 = vpop.permute.xlu0 %721
    %v724 = vmul.f32 %v704, %v722
    %vm725 = vcmp.gt.s32.totalorder %v31, 5
    %v726 = vsel %vm725, 1, 0
    %727 = vset.pattern.permute.xlu0 0
    %728 = vperm.xlu0 %727, %v726
    %v729 = vpop.permute.xlu0 %728
    %vm730 = vcmp.eq.s32.totalorder %v729, 1
    %v732 = vrot.slane %v724, 4
    %733 = vrot.lane.b32.xlu0 %v732, 80
    %v734 = vpop.permute.xlu0 %733
    %737 = vrot.lane.b32.xlu0 %v633, 80
    %v738 = vpop.permute.xlu0 %737
    %v740 = vsel %vm730, %v734, %v738
    %v742 = vrot.slane %v718, 4
    %743 = vrot.lane.b32.xlu0 %v742, 112
    %v744 = vpop.permute.xlu0 %743
    %746 = vrot.lane.b32.xlu0 %v634, 112
    %v747 = vpop.permute.xlu0 %746
    %v749 = vsel %vm730, %v744, %v747
    %vm750 = vcmp.eq.s32.totalorder %v31, 6
    %v751 = vsel %vm750, 1, 0
    %752 = vset.pattern.permute.xlu0 0
    %753 = vperm.xlu0 %752, %v751
    %v754 = vpop.permute.xlu0 %753
    %vm755 = vcmp.eq.s32.totalorder %v754, 1
    %v757 = vrot.slane %v110, 4
    %758 = vrot.lane.b32.xlu0 %v757, 64
    %v759 = vpop.permute.xlu0 %758
    %762 = vrot.lane.b32.xlu0 %v645, 64
    %v763 = vpop.permute.xlu0 %762
    %v765 = vsel %vm755, %v759, %v763
    %v766 = vpack.c.bf16 %v740, %v740
    %v768 = vsel %vm127, %v766, 0
    %770 = vmatprep.subr.bf16.mxu0 0
    %771 = vmatpush1.bf16.msra.mxu0 %v125
    %772 = vmatprep.subr.bf16.mxu0 0
    %773 = vmatpush1.bf16.msra.mxu0 0
    %774 = vmatprep.subr.bf16.mxu0 0
    %775 = vmatpush1.bf16.msra.mxu0 0
    %776 = vmatprep.subr.bf16.mxu0 0
    %777 = vmatpush1.bf16.msra.mxu0 0
    %778 = vmatprep.subr.bf16.mxu0 0
    %779 = vmatpush1.bf16.msra.mxu0 0
    %780 = vmatprep.subr.bf16.mxu0 0
    %781 = vmatpush1.bf16.msra.mxu0 0
    %782 = vmatprep.subr.bf16.mxu0 0
    %783 = vmatpush1.bf16.msra.mxu0 0
    %784 = vmatprep.subr.bf16.mxu0 0
    %785 = vmatpush1.bf16.msra.mxu0 0
    %786 = vmatprep.subr.bf16.mxu0 0
    %787 = vmatpush1.bf16.msra.mxu0 0
    %788 = vmatprep.subr.bf16.mxu0 0
    %789 = vmatpush1.bf16.msra.mxu0 0
    %790 = vmatprep.subr.bf16.mxu0 0
    %791 = vmatpush1.bf16.msra.mxu0 0
    %792 = vmatprep.subr.bf16.mxu0 0
    %793 = vmatpush1.bf16.msra.mxu0 0
    %794 = vmatprep.subr.bf16.mxu0 0
    %795 = vmatpush1.bf16.msra.mxu0 0
    %796 = vmatprep.subr.bf16.mxu0 0
    %797 = vmatpush1.bf16.msra.mxu0 0
    %798 = vmatprep.subr.bf16.mxu0 0
    %799 = vmatpush1.bf16.msra.mxu0 0
    %800 = vmatprep.subr.bf16.mxu0 0
    %801 = vmatpush1.bf16.msra.mxu0 0
    %802 = vmatprep.mubr.bf16.mxu0 0
    %803 = vmatmul.mubr.bf16.gmra.mrb[0].mxu0 %v768
    %v804 = vpop.f32.mrb[0].mxu0
    %v805 = vadd.f32 0.0, %v804
    %v806 = vpop.f32.mrb[0].mxu0
    %v807 = vpop.f32.mrb[0].mxu0
    %v808 = vpop.f32.mrb[0].mxu0
    %809 = vdwg.mxu0
    %v810 = vadd.f32 %v113, %v805
    %v811 = vtanh.pop %v810
    %v812 = vxor.u32 %v810, 2147483648
    %v813 = vmul.f32 %v812, 1.442695
    %v814 = vpow.pop %v813
    %v815 = vadd.f32 %v814, 1.0
    %v816 = vrcp.pop %v815
    %v817 = vmul.f32 1.0, %v816
    %v818 = vsel %vm120, %v811, %v817
    %820 = vrot.lane.b32.xlu0 %v749, 16
    %v821 = vpop.permute.xlu0 %820
    %v823 = vmul.f32 %v818, %v821
    %825 = vrot.lane.b32.xlu0 %v818, 96
    %v826 = vpop.permute.xlu0 %825
    %v828 = vmul.f32 %v818, %v826
    %830 = vrot.lane.b32.xlu0 %v828, 16
    %v831 = vpop.permute.xlu0 %830
    %v833 = vadd.f32 %v823, %v831
    %v834 = vtanh.pop %v833
    %836 = vrot.lane.b32.xlu0 %v834, 32
    %v837 = vpop.permute.xlu0 %836
    %v839 = vmul.f32 %v818, %v837
    %vm840 = vcmp.gt.s32.totalorder %v31, 6
    %v841 = vsel %vm840, 1, 0
    %842 = vset.pattern.permute.xlu0 0
    %843 = vperm.xlu0 %842, %v841
    %v844 = vpop.permute.xlu0 %843
    %vm845 = vcmp.eq.s32.totalorder %v844, 1
    %847 = vrot.lane.b32.xlu0 %v740, 48
    %v848 = vpop.permute.xlu0 %847
    %v850 = vsel %vm845, %v839, %v848
    %v851 = vsel %vm845, %v833, %v821
    %vm852 = vcmp.eq.s32.totalorder %v31, 7
    %v853 = vsel %vm852, 1, 0
    %854 = vset.pattern.permute.xlu0 0
    %855 = vperm.xlu0 %854, %v853
    %v856 = vpop.permute.xlu0 %855
    %vm857 = vcmp.eq.s32.totalorder %v856, 1
    %859 = vrot.lane.b32.xlu0 %v765, 64
    %v860 = vpop.permute.xlu0 %859
    %v862 = vsel %vm857, %v113, %v860
    %v863 = vpack.c.bf16 %v850, %v850
    %865 = vrot.lane.b32.xlu0 %v863, 80
    %v866 = vpop.permute.xlu0 %865
    %v868 = vsel %vm127, %v866, 0
    %870 = vmatprep.subr.bf16.mxu0 0
    %871 = vmatpush1.bf16.msra.mxu0 %v125
    %872 = vmatprep.subr.bf16.mxu0 0
    %873 = vmatpush1.bf16.msra.mxu0 0
    %874 = vmatprep.subr.bf16.mxu0 0
    %875 = vmatpush1.bf16.msra.mxu0 0
    %876 = vmatprep.subr.bf16.mxu0 0
    %877 = vmatpush1.bf16.msra.mxu0 0
    %878 = vmatprep.subr.bf16.mxu0 0
    %879 = vmatpush1.bf16.msra.mxu0 0
    %880 = vmatprep.subr.bf16.mxu0 0
    %881 = vmatpush1.bf16.msra.mxu0 0
    %882 = vmatprep.subr.bf16.mxu0 0
    %883 = vmatpush1.bf16.msra.mxu0 0
    %884 = vmatprep.subr.bf16.mxu0 0
    %885 = vmatpush1.bf16.msra.mxu0 0
    %886 = vmatprep.subr.bf16.mxu0 0
    %887 = vmatpush1.bf16.msra.mxu0 0
    %888 = vmatprep.subr.bf16.mxu0 0
    %889 = vmatpush1.bf16.msra.mxu0 0
    %890 = vmatprep.subr.bf16.mxu0 0
    %891 = vmatpush1.bf16.msra.mxu0 0
    %892 = vmatprep.subr.bf16.mxu0 0
    %893 = vmatpush1.bf16.msra.mxu0 0
    %894 = vmatprep.subr.bf16.mxu0 0
    %895 = vmatpush1.bf16.msra.mxu0 0
    %896 = vmatprep.subr.bf16.mxu0 0
    %897 = vmatpush1.bf16.msra.mxu0 0
    %898 = vmatprep.subr.bf16.mxu0 0
    %899 = vmatpush1.bf16.msra.mxu0 0
    %900 = vmatprep.subr.bf16.mxu0 0
    %901 = vmatpush1.bf16.msra.mxu0 0
    %902 = vmatprep.mubr.bf16.mxu0 0
    %903 = vmatmul.mubr.bf16.gmra.mrb[0].mxu0 %v868
    %v904 = vpop.f32.mrb[0].mxu0
    %v905 = vadd.f32 0.0, %v904
    %v906 = vpop.f32.mrb[0].mxu0
    %v907 = vpop.f32.mrb[0].mxu0
    %v908 = vpop.f32.mrb[0].mxu0
    %909 = vdwg.mxu0
    %v911 = vrot.slane %v905, 4
    %v913 = vadd.f32 %v113, %v911
    %v914 = vtanh.pop %v913
    %v915 = vxor.u32 %v913, 2147483648
    %v916 = vmul.f32 %v915, 1.442695
    %v917 = vpow.pop %v916
    %v918 = vadd.f32 %v917, 1.0
    %v919 = vrcp.pop %v918
    %v920 = vmul.f32 1.0, %v919
    %v921 = vsel %vm120, %v914, %v920
    %v923 = vrot.slane %v851, 4
    %v925 = vmul.f32 %v921, %v923
    %927 = vrot.lane.b32.xlu0 %v921, 96
    %v928 = vpop.permute.xlu0 %927
    %v930 = vmul.f32 %v921, %v928
    %932 = vrot.lane.b32.xlu0 %v930, 16
    %v933 = vpop.permute.xlu0 %932
    %v935 = vadd.f32 %v925, %v933
    %v936 = vtanh.pop %v935
    %938 = vrot.lane.b32.xlu0 %v936, 32
    %v939 = vpop.permute.xlu0 %938
    %v941 = vmul.f32 %v921, %v939
    %vm942 = vcmp.gt.s32.totalorder %v31, 7
    %v943 = vsel %vm942, 1, 0
    %944 = vset.pattern.permute.xlu0 0
    %945 = vperm.xlu0 %944, %v943
    %v946 = vpop.permute.xlu0 %945
    %vm947 = vcmp.eq.s32.totalorder %v946, 1
    %v949 = vrot.slane %v941, 4
    %950 = vrot.lane.b32.xlu0 %v949, 80
    %v951 = vpop.permute.xlu0 %950
    %954 = vrot.lane.b32.xlu0 %v850, 80
    %v955 = vpop.permute.xlu0 %954
    %v957 = vsel %vm947, %v951, %v955
    %vm958 = vcmp.eq.s32.totalorder %v31, 8
    %v959 = vsel %vm958, 1, 0
    %960 = vset.pattern.permute.xlu0 0
    %961 = vperm.xlu0 %960, %v959
    %v962 = vpop.permute.xlu0 %961
    %vm963 = vcmp.eq.s32.totalorder %v962, 1
    %v965 = vrot.slane %v113, 4
    %966 = vrot.lane.b32.xlu0 %v965, 64
    %v967 = vpop.permute.xlu0 %966
    %970 = vrot.lane.b32.xlu0 %v862, 64
    %v971 = vpop.permute.xlu0 %970
    %v973 = vsel %vm963, %v967, %v971
    %v974 = vtanh.pop %v973
    %v975 = vxor.u32 %v973, 2147483648
    %v976 = vmul.f32 %v975, 1.442695
    %v977 = vpow.pop %v976
    %v978 = vadd.f32 %v977, 1.0
    %v979 = vrcp.pop %v978
    %v980 = vmul.f32 1.0, %v979
    %v981 = vsel %vm120, %v974, %v980
    %983 = vrot.lane.b32.xlu0 %v981, 96
    %v984 = vpop.permute.xlu0 %983
    %v986 = vmul.f32 %v981, %v984
    %v987 = vtanh.pop %v986
    %989 = vrot.lane.b32.xlu0 %v987, 48
    %v990 = vpop.permute.xlu0 %989
    %v992 = vmul.f32 %v981, %v990
    %v993 = vpack.c.bf16 %v957, %v957
    %v994 = vld [vmem:[%s5] sm:$0xf]
    %v995 = vld [vmem:[%s5 + $0x4] sm:$0xf]
    %v996 = vpack.c.bf16 %v992, %v992
    %v997 = vld [vmem:[%s6] sm:$0xf]
    %v998 = vld [vmem:[%s6 + $0x4] sm:$0xf]
    %1000 = vrot.lane.b32.xlu0 %v996, 80
    %v1001 = vpop.permute.xlu0 %1000
    %v1004 = vunpack.c.l.b16 %v997
    %v1005 = vunpack.c.l.b16 %v998
    %v1006 = vpack.c.b16 %v1005, %v1004
    %v1009 = vsel %vm127, %v1001, 0
    %1011 = vmatprep.subr.bf16.mxu0 0
    %1012 = vmatpush1.bf16.msra.mxu0 %v1006
    %1013 = vmatprep.subr.bf16.mxu0 0
    %1014 = vmatpush1.bf16.msra.mxu0 0
    %1015 = vmatprep.subr.bf16.mxu0 0
    %1016 = vmatpush1.bf16.msra.mxu0 0
    %1017 = vmatprep.subr.bf16.mxu0 0
    %1018 = vmatpush1.bf16.msra.mxu0 0
    %1019 = vmatprep.subr.bf16.mxu0 0
    %1020 = vmatpush1.bf16.msra.mxu0 0
    %1021 = vmatprep.subr.bf16.mxu0 0
    %1022 = vmatpush1.bf16.msra.mxu0 0
    %1023 = vmatprep.subr.bf16.mxu0 0
    %1024 = vmatpush1.bf16.msra.mxu0 0
    %1025 = vmatprep.subr.bf16.mxu0 0
    %1026 = vmatpush1.bf16.msra.mxu0 0
    %1027 = vmatprep.subr.bf16.mxu0 0
    %1028 = vmatpush1.bf16.msra.mxu0 0
    %1029 = vmatprep.subr.bf16.mxu0 0
    %1030 = vmatpush1.bf16.msra.mxu0 0
    %1031 = vmatprep.subr.bf16.mxu0 0
    %1032 = vmatpush1.bf16.msra.mxu0 0
    %1033 = vmatprep.subr.bf16.mxu0 0
    %1034 = vmatpush1.bf16.msra.mxu0 0
    %1035 = vmatprep.subr.bf16.mxu0 0
    %1036 = vmatpush1.bf16.msra.mxu0 0
    %1037 = vmatprep.subr.bf16.mxu0 0
    %1038 = vmatpush1.bf16.msra.mxu0 0
    %1039 = vmatprep.subr.bf16.mxu0 0
    %1040 = vmatpush1.bf16.msra.mxu0 0
    %1041 = vmatprep.subr.bf16.mxu0 0
    %1042 = vmatpush1.bf16.msra.mxu0 0
    %1043 = vmatprep.mubr.bf16.mxu0 0
    %1044 = vmatmul.mubr.bf16.gmra.mrb[0].mxu0 %v1009
    %v1045 = vpop.f32.mrb[0].mxu0
    %v1046 = vadd.f32 0.0, %v1045
    %v1047 = vpop.f32.mrb[0].mxu0
    %v1048 = vpop.f32.mrb[0].mxu0
    %v1049 = vpop.f32.mrb[0].mxu0
    %1050 = vdwg.mxu0
    %v1053 = vunpack.c.l.b16 %v994
    %v1054 = vunpack.c.l.b16 %v995
    %v1055 = vpack.c.b16 %v1054, %v1053
    %v1058 = vsel %vm127, %v993, 0
    %1060 = vmatprep.subr.bf16.mxu0 0
    %1061 = vmatpush1.bf16.msra.mxu0 %v1055
    %1062 = vmatprep.subr.bf16.mxu0 0
    %1063 = vmatpush1.bf16.msra.mxu0 0
    %1064 = vmatprep.subr.bf16.mxu0 0
    %1065 = vmatpush1.bf16.msra.mxu0 0
    %1066 = vmatprep.subr.bf16.mxu0 0
    %1067 = vmatpush1.bf16.msra.mxu0 0
    %1068 = vmatprep.subr.bf16.mxu0 0
    %1069 = vmatpush1.bf16.msra.mxu0 0
    %1070 = vmatprep.subr.bf16.mxu0 0
    %1071 = vmatpush1.bf16.msra.mxu0 0
    %1072 = vmatprep.subr.bf16.mxu0 0
    %1073 = vmatpush1.bf16.msra.mxu0 0
    %1074 = vmatprep.subr.bf16.mxu0 0
    %1075 = vmatpush1.bf16.msra.mxu0 0
    %1076 = vmatprep.subr.bf16.mxu0 0
    %1077 = vmatpush1.bf16.msra.mxu0 0
    %1078 = vmatprep.subr.bf16.mxu0 0
    %1079 = vmatpush1.bf16.msra.mxu0 0
    %1080 = vmatprep.subr.bf16.mxu0 0
    %1081 = vmatpush1.bf16.msra.mxu0 0
    %1082 = vmatprep.subr.bf16.mxu0 0
    %1083 = vmatpush1.bf16.msra.mxu0 0
    %1084 = vmatprep.subr.bf16.mxu0 0
    %1085 = vmatpush1.bf16.msra.mxu0 0
    %1086 = vmatprep.subr.bf16.mxu0 0
    %1087 = vmatpush1.bf16.msra.mxu0 0
    %1088 = vmatprep.subr.bf16.mxu0 0
    %1089 = vmatpush1.bf16.msra.mxu0 0
    %1090 = vmatprep.subr.bf16.mxu0 0
    %1091 = vmatpush1.bf16.msra.mxu0 0
    %1092 = vmatprep.mubr.bf16.mxu0 0
    %1093 = vmatmul.mubr.bf16.gmra.mrb[0].mxu0 %v1058
    %v1094 = vpop.f32.mrb[0].mxu0
    %v1095 = vadd.f32 %v1046, %v1094
    %v1096 = vpop.f32.mrb[0].mxu0
    %v1097 = vpop.f32.mrb[0].mxu0
    %v1098 = vpop.f32.mrb[0].mxu0
    %1099 = vdwg.mxu0
    %v1100 = vld [vmem:[%s7] sm:$0x1]
    %v1102 = vlaneseq
    %v1103 = vshrl.u32 %v1102, 7
    %v1104 = vsub.s32 0, %v1103
    %v1105 = vrot.slane %v1100, %v1104
    %v1107 = vadd.f32 %v1095, %v1105
    %1108 = vst [vmem:[#allocation2] sm:$0xf] %v1107
    // Predicated region
    $region34: #{tpu_custom_call.1} parent=1 // pred_check
      _
    $region35: #{tpu_custom_call.1} parent=1 // pred_check_branch
      %1110 = sbr.rel (0) target = $region37
    $region36: #{tpu_custom_call.1} parent=1 // pred_region
      %s1112 = ssub.s32 64, 64
      %1113 = vsyncadd [#allocation3], %s1112
      %s1115 = sshll.u32 [#allocation2], 4
      %s1116 = int_to_ptr.vmem [resolvable:$true] %s1115
      %1118 = dma.vmem_to_hbm [thread:$0]  %s1116, 64, %s8, [#allocation3]
    $region37: #{tpu_custom_call.1} parent=1 // pred_fallthru
      _
    // Predicated region
    $region38: #{tpu_custom_call.1} parent=1 // pred_check
      _
    $region39: #{tpu_custom_call.1} parent=1 // pred_check_branch
      %1120 = sbr.rel (0) target = $region41
    $region40: #{tpu_custom_call.1} parent=1 // pred_region
      %1121 = dma.done [#allocation3], 64
    $region41: #{tpu_custom_call.1} parent=1 // pred_fallthru
      _
    %1122 = vsyncpa [#allocation3], 1

</llo_original>
